<compile_context>
chip_gen: v7x
topology: tpu7x:2x2x1
jax: 0.10.0
libtpu: 0.0.40
codegen_flags: <defaults>
</compile_context>

<pallas_src>
import functools

import jax
import jax.numpy as jnp
from jax.experimental import pallas as pl
from jax.experimental.pallas import tpu as pltpu

HIDDEN = 64          # module's self.hidden
DEFAULT_TB = 256     # batch tile (multiple of 8); swept-friendly


def _round_up(x, m):
    return ((x + m - 1) // m) * m


def _sigmoid(x):
    return 1.0 / (1.0 + jnp.exp(-x))


def _softplus(x):
    # numerically stable log(1 + exp(x)) using only exp/log/abs/max
    return jnp.maximum(x, 0.0) + jnp.log(1.0 + jnp.exp(-jnp.abs(x)))


# ----------------------------------------------------------------------------
# Parameter init (uniform +-1/sqrt(fan_in), torch-like), weights as (fin, fout)
# ----------------------------------------------------------------------------
def init_params(key, num_channels):
    C, H = num_channels, HIDDEN
    dims = []
    dims += [(C, H // 2), (H // 2, H)]                                    # conv_theta
    dims += [(2 * H, H // 2), (H // 2, H // 2)]                           # latent_encoder
    dims += [(2 * H, H // 2)] + [(H // 2, H // 2)] * 5 + [(H // 2, C)]    # mask_
    dims += [(H // 4 + 2 * H, H // 2)] + [(H // 2, H // 2)] * 5 + [(H // 2, 2 * C)]  # cnn
    params = []
    for i, (fin, fout) in enumerate(dims):
        kw, kb = jax.random.split(jax.random.fold_in(key, i))
        bound = 1.0 / (fin ** 0.5)
        Wm = jax.random.uniform(kw, (fin, fout), jnp.float32, -bound, bound)
        b = jax.random.uniform(kb, (1, fout), jnp.float32, -bound, bound)
        params += [Wm, b]
    return params


# ----------------------------------------------------------------------------
# Host-side packing of all weights/biases into two VMEM-friendly blobs.
# ----------------------------------------------------------------------------
def pack_params(params, C):
    H = HIDDEN

    def Wp(i):
        return params[2 * i].astype(jnp.float32)

    def Bp(i):
        return params[2 * i + 1].astype(jnp.float32).reshape(1, -1)

    w_ct0, b_ct0 = Wp(0), Bp(0)          # (C,32)
    w_ct1, b_ct1 = Wp(1), Bp(1)          # (32,64)
    w_le0, b_le0 = Wp(2), Bp(2)          # (128,32)
    w_le1, b_le1 = Wp(3), Bp(3)          # (32,32)
    w_m = [Wp(4 + i) for i in range(7)]
    b_m = [Bp(4 + i) for i in range(7)]
    w_c = [Wp(11 + i) for i in range(7)]
    b_c = [Bp(11 + i) for i in range(7)]

    Z = lambda r, c: jnp.zeros((r, c), jnp.float32)

    mats = {}
    # conv_theta layer 0, fused for signal (cols 0:32) / density (cols 32:64)
    mats["ct0L"] = jnp.concatenate([w_ct0, Z(C, 32)], axis=1)                 # (C,64)
    mats["ct0R"] = jnp.concatenate([Z(C, 32), w_ct0], axis=1)                 # (C,64)
    # conv_theta layer 1, block-diagonal -> R = [signal(64) | density(64)]
    mats["ct1"] = jnp.block([[w_ct1, Z(32, 64)], [Z(32, 64), w_ct1]])         # (64,128)
    # latent encoder
    mats["le0"] = w_le0                                                       # (128,32)
    mats["le1a"] = w_le1[:, : H // 4]                                         # (32,16) -> z_loc
    mats["le1b"] = w_le1[:, H // 4:]                                          # (32,16) -> z_scale raw
    # fused heads: cols 0:32 = mask_ path, cols 32:64 = cnn path
    mats["head0"] = jnp.concatenate([w_m[0], w_c[0][: 2 * H, :]], axis=1)     # (128,64)
    mats["head0z"] = jnp.concatenate([Z(H // 4, 32), w_c[0][2 * H:, :]], axis=1)  # (16,64)
    for d in range(5):
        mats[f"mid{d}"] = jnp.block(
            [[w_m[1 + d], Z(32, 32)], [Z(32, 32), w_c[1 + d]]])               # (64,64)
    # last layer: cols 0:2C = cnn (mean|std_raw), cols 2C:3C = mask logit
    mats["last"] = jnp.block([[Z(32, 2 * C), w_m[6]], [w_c[6], Z(32, C)]])    # (64,3C)

    biases = {}
    biases["ct0"] = jnp.concatenate([b_ct0, b_ct0], axis=1)                   # (1,64)
    biases["ct1"] = jnp.concatenate([b_ct1, b_ct1], axis=1)                   # (1,128)
    biases["le0"] = b_le0
    biases["le1a"] = b_le1[:, : H // 4]
    biases["le1b"] = b_le1[:, H // 4:]
    biases["head0"] = jnp.concatenate([b_m[0], b_c[0]], axis=1)               # (1,64)
    for d in range(5):
        biases[f"mid{d}"] = jnp.concatenate([b_m[1 + d], b_c[1 + d]], axis=1)
    biases["last"] = jnp.concatenate([b_c[6], b_m[6]], axis=1)                # (1,3C)

    # weight blob: each matrix padded to 128 lanes, 8-row-aligned offsets
    woff, rows, off = {}, [], 0
    for name, m in mats.items():
        r, c = m.shape
        rp = _round_up(r, 8)
        rows.append(jnp.zeros((rp, 128), jnp.float32).at[:r, :c].set(m))
        woff[name] = (off, r, c)
        off += rp
    wblob = jnp.concatenate(rows, axis=0)

    # bias blob: one 128-wide row per layer bias
    boff, brows = {}, []
    for i, (name, b) in enumerate(biases.items()):
        c = b.shape[1]
        brows.append(jnp.zeros((1, 128), jnp.float32).at[:, :c].set(b))
        boff[name] = (i, c)
    pad_rows = _round_up(len(brows), 8) - len(brows)
    brows += [jnp.zeros((1, 128), jnp.float32)] * pad_rows
    bblob = jnp.concatenate(brows, axis=0)

    return wblob, bblob, woff, boff


# ----------------------------------------------------------------------------
# Kernel
# ----------------------------------------------------------------------------
def mlp_lnp_mnar_kernel(x_ref, m_ref, eps_ref, w_ref, b_ref, out_ref, *, C, woff, boff):
    def W(name):
        o, r, c = woff[name]
        return w_ref[o:o + r, 0:c]

    def Bv(name):
        i, c = boff[name]
        return b_ref[i:i + 1, 0:c]

    dot = functools.partial(jnp.dot, preferred_element_type=jnp.float32)

    x = x_ref[...].astype(jnp.float32)
    m = m_ref[...].astype(jnp.float32)
    eps = eps_ref[...].astype(jnp.float32)

    # conv_theta applied to signal=(x*m) and density=(m), fused via block weights
    h1 = jnp.maximum(dot(x * m, W("ct0L")) + dot(m, W("ct0R")) + Bv("ct0"), 0.0)  # (TB,64)
    R = dot(h1, W("ct1")) + Bv("ct1")                                             # (TB,128) = [signal|density]

    # latent encoder q(z | R); reparameterized sample with provided eps (n_z_samples = 1)
    q1 = jnp.maximum(dot(R, W("le0")) + Bv("le0"), 0.0)                           # (TB,32)
    z_loc = dot(q1, W("le1a")) + Bv("le1a")                                        # (TB,16)
    z_scale = jnp.abs(0.1 + 0.9 * _sigmoid(dot(q1, W("le1b")) + Bv("le1b")))
    z = z_loc + z_scale * eps                                                      # (TB,16)

    # fused mask_ / cnn heads: cols 0:32 = mask_ path, cols 32:64 = cnn path
    h = jnp.maximum(dot(R, W("head0")) + dot(z, W("head0z")) + Bv("head0"), 0.0)   # (TB,64)
    for d in range(5):
        h = jnp.maximum(dot(h, W(f"mid{d}")) + Bv(f"mid{d}"), 0.0)
    raw = dot(h, W("last")) + Bv("last")                                           # (TB,3C) = [mean|std_raw|mask_logit]

    col = jax.lax.broadcasted_iota(jnp.int32, raw.shape, 1)
    out = jnp.where(col < C, raw,
                    jnp.where(col < 2 * C, _softplus(raw), _sigmoid(raw)))
    out_ref[...] = out.astype(out_ref.dtype)
    # TODO(synk): the torch.distributions.MultivariateNormal return object has no
    # Pallas equivalent; it is fully determined by the (mean, std) emitted here,
    # and the rsample RNG is replaced by the explicit standard-normal `eps` input.


# ----------------------------------------------------------------------------
# Wrapper
# ----------------------------------------------------------------------------
def mlp_lnp_mnar_forward(x_trgt, mask, eps, params, *, tb=DEFAULT_TB):
    B, C = x_trgt.shape
    wblob, bblob, woff, boff = pack_params(params, C)

    TB = min(tb, _round_up(B, 8))          # keep tile a multiple of 8
    B_pad = _round_up(B, TB)
    pad = B_pad - B
    xp = jnp.pad(x_trgt.astype(jnp.float32), ((0, pad), (0, 0)))
    mp = jnp.pad(mask.astype(jnp.float32), ((0, pad), (0, 0)))
    ep = jnp.pad(eps.astype(jnp.float32), ((0, pad), (0, 0)))

    grid = (B_pad // TB,)

    def bspec(n):
        return pl.BlockSpec((TB, n), lambda i: (i, 0))

    def rep(a):
        return pl.BlockSpec(a.shape, lambda i: (0, 0))

    kernel = functools.partial(mlp_lnp_mnar_kernel, C=C, woff=woff, boff=boff)

    out = pl.pallas_call(
        kernel,
        grid=grid,
        in_specs=[bspec(C), bspec(C), bspec(HIDDEN // 4), rep(wblob), rep(bblob)],
        out_specs=pl.BlockSpec((TB, 3 * C), lambda i: (i, 0)),
        out_shape=jax.ShapeDtypeStruct((B_pad, 3 * C), jnp.float32),
        compiler_params=pltpu.CompilerParams(dimension_semantics=("parallel",)),
    )(xp, mp, ep, wblob, bblob)

    mean = out[:B, :C]
    std = out[:B, C:2 * C]
    mask_pred = out[:B, 2 * C:3 * C]
    return mean, std, mask_pred


# ----------------------------------------------------------------------------
# Pure-JAX reference (mirrors the PyTorch module) for correctness checking
# ----------------------------------------------------------------------------
def _reference_forward(x, mask, eps, params, C):
    H = HIDDEN
    hp = jax.lax.Precision.HIGHEST

    def lin(h, i):
        return jnp.dot(h, params[2 * i], precision=hp) + params[2 * i + 1]

    relu = lambda v: jnp.maximum(v, 0.0)

    def conv_theta(h):
        return lin(relu(lin(h, 0)), 1)

    signal = conv_theta(x * mask)
    density = conv_theta(mask)
    R = jnp.concatenate([signal, density], axis=-1)

    h = R
    for i in range(4, 10):
        h = relu(lin(h, i))
    mask_pred = _sigmoid(lin(h, 10))

    q = lin(relu(lin(R, 2)), 3)
    z_loc, z_scale_raw = q[:, : H // 4], q[:, H // 4:]
    z_scale = jnp.abs(0.1 + 0.9 * _sigmoid(z_scale_raw))
    z = z_loc + z_scale * eps

    h = jnp.concatenate([R, z], axis=-1)
    h = relu(lin(h, 11))
    for i in range(12, 17):
        h = relu(lin(h, i))
    f = lin(h, 17)
    mean, std_raw = f[:, :C], f[:, C:]
    return mean, _softplus(std_raw), mask_pred


if __name__ == "__main__":
    B, C = 2, 4
    key = jax.random.PRNGKey(0)
    kx, km, ke, kp = jax.random.split(key, 4)

    x_trgt = jax.random.normal(kx, (B, C), jnp.float32)
    mask = (jax.random.uniform(km, (B, C)) > 0.3).astype(jnp.float32)
    eps = jax.random.normal(ke, (B, HIDDEN // 4), jnp.float32)   # N(0,1) for rsample
    params = init_params(kp, C)

    mean, std, mask_pred = mlp_lnp_mnar_forward(x_trgt, mask, eps, params)
    jax.block_until_ready((mean, std, mask_pred))

    assert mean.shape == (B, C)
    assert std.shape == (B, C)
    assert mask_pred.shape == (B, C)
    assert bool(jnp.all(std > 0.0))                                     # softplus output
    assert bool(jnp.all((mask_pred >= 0.0) & (mask_pred <= 1.0)))       # sigmoid output

    mean_r, std_r, mp_r = _reference_forward(x_trgt, mask, eps, params, C)
    assert bool(jnp.allclose(mean, mean_r, atol=5e-3, rtol=5e-3))
    assert bool(jnp.allclose(std, std_r, atol=5e-3, rtol=5e-3))
    assert bool(jnp.allclose(mask_pred, mp_r, atol=5e-3, rtol=5e-3))

    print("KERNEL_OK")
</pallas_src>

<mosaic_0001>
module attributes {stable_mosaic.version = 11 : i64} {
  func.func @mlp_lnp_mnar_kernel(%arg0: i32, %arg1: memref<8x4xf32, #tpu.memory_space<vmem>>, %arg2: memref<8x4xf32, #tpu.memory_space<vmem>>, %arg3: memref<8x16xf32, #tpu.memory_space<vmem>>, %arg4: memref<800x128xf32, #tpu.memory_space<vmem>>, %arg5: memref<16x128xf32, #tpu.memory_space<vmem>>, %arg6: memref<8x12xf32, #tpu.memory_space<vmem>>) attributes {dimension_semantics = [#tpu.dimension_semantics<parallel>], iteration_bounds = array<i64: 1>, scalar_prefetch = 0 : i64, scratch_operands = 0 : i64, tpu.core_type = #tpu.core_type<tc>, window_params = [{transform_indices = @transform_0, window_bounds = array<i64: 8, 4>}, {transform_indices = @transform_1, window_bounds = array<i64: 8, 4>}, {transform_indices = @transform_2, window_bounds = array<i64: 8, 16>}, {pipeline_mode = #tpu.pipeline_mode<synchronous>, transform_indices = @transform_3, window_bounds = array<i64: 800, 128>}, {pipeline_mode = #tpu.pipeline_mode<synchronous>, transform_indices = @transform_4, window_bounds = array<i64: 16, 128>}, {transform_indices = @transform_5, window_bounds = array<i64: 8, 12>}]} {
    %c0 = arith.constant 0 : index
    %c0_0 = arith.constant 0 : index
    %0 = vector.load %arg1[%c0, %c0_0] : memref<8x4xf32, #tpu.memory_space<vmem>>, vector<8x4xf32>
    %c0_1 = arith.constant 0 : index
    %c0_2 = arith.constant 0 : index
    %1 = vector.load %arg2[%c0_1, %c0_2] : memref<8x4xf32, #tpu.memory_space<vmem>>, vector<8x4xf32>
    %c0_3 = arith.constant 0 : index
    %c0_4 = arith.constant 0 : index
    %2 = vector.load %arg3[%c0_3, %c0_4] : memref<8x16xf32, #tpu.memory_space<vmem>>, vector<8x16xf32>
    %3 = arith.mulf %0, %1 : vector<8x4xf32>
    %c0_5 = arith.constant 0 : index
    %c0_6 = arith.constant 0 : index
    %4 = vector.load %arg4[%c0_5, %c0_6] : memref<800x128xf32, #tpu.memory_space<vmem>>, vector<4x64xf32>
    %cst = arith.constant dense<0.000000e+00> : vector<8x64xf32>
    %5 = tpu.matmul %3, %4, %cst {dimension_numbers = #tpu.dot_dimension_numbers<[1], [0], [0], [1], [0, 0, 1, 1], [], []>} : vector<8x4xf32>, vector<4x64xf32>, vector<8x64xf32> -> vector<8x64xf32>
    %c8 = arith.constant 8 : index
    %c0_7 = arith.constant 0 : index
    %6 = vector.load %arg4[%c8, %c0_7] : memref<800x128xf32, #tpu.memory_space<vmem>>, vector<4x64xf32>
    %cst_8 = arith.constant dense<0.000000e+00> : vector<8x64xf32>
    %7 = tpu.matmul %1, %6, %cst_8 {dimension_numbers = #tpu.dot_dimension_numbers<[1], [0], [0], [1], [0, 0, 1, 1], [], []>} : vector<8x4xf32>, vector<4x64xf32>, vector<8x64xf32> -> vector<8x64xf32>
    %8 = arith.addf %5, %7 : vector<8x64xf32>
    %c0_9 = arith.constant 0 : index
    %c0_10 = arith.constant 0 : index
    %9 = vector.load %arg5[%c0_9, %c0_10] : memref<16x128xf32, #tpu.memory_space<vmem>>, vector<1x64xf32>
    %10 = vector.broadcast %9 : vector<1x64xf32> to vector<8x64xf32>
    %11 = arith.addf %8, %10 : vector<8x64xf32>
    %cst_11 = arith.constant 0.000000e+00 : f32
    %12 = vector.broadcast %cst_11 : f32 to vector<8x64xf32>
    %13 = arith.maximumf %11, %12 : vector<8x64xf32>
    %c16 = arith.constant 16 : index
    %c0_12 = arith.constant 0 : index
    %14 = vector.load %arg4[%c16, %c0_12] : memref<800x128xf32, #tpu.memory_space<vmem>>, vector<64x128xf32>
    %cst_13 = arith.constant dense<0.000000e+00> : vector<8x128xf32>
    %15 = tpu.matmul %13, %14, %cst_13 {dimension_numbers = #tpu.dot_dimension_numbers<[1], [0], [0], [1], [0, 0, 1, 1], [], []>} : vector<8x64xf32>, vector<64x128xf32>, vector<8x128xf32> -> vector<8x128xf32>
    %c1 = arith.constant 1 : index
    %c0_14 = arith.constant 0 : index
    %16 = vector.load %arg5[%c1, %c0_14] : memref<16x128xf32, #tpu.memory_space<vmem>>, vector<1x128xf32>
    %17 = vector.broadcast %16 : vector<1x128xf32> to vector<8x128xf32>
    %18 = arith.addf %15, %17 : vector<8x128xf32>
    %c80 = arith.constant 80 : index
    %c0_15 = arith.constant 0 : index
    %19 = vector.load %arg4[%c80, %c0_15] : memref<800x128xf32, #tpu.memory_space<vmem>>, vector<128x32xf32>
    %cst_16 = arith.constant dense<0.000000e+00> : vector<8x32xf32>
    %20 = tpu.matmul %18, %19, %cst_16 {dimension_numbers = #tpu.dot_dimension_numbers<[1], [0], [0], [1], [0, 0, 1, 1], [], []>} : vector<8x128xf32>, vector<128x32xf32>, vector<8x32xf32> -> vector<8x32xf32>
    %c2 = arith.constant 2 : index
    %c0_17 = arith.constant 0 : index
    %21 = vector.load %arg5[%c2, %c0_17] : memref<16x128xf32, #tpu.memory_space<vmem>>, vector<1x32xf32>
    %22 = vector.broadcast %21 : vector<1x32xf32> to vector<8x32xf32>
    %23 = arith.addf %20, %22 : vector<8x32xf32>
    %cst_18 = arith.constant 0.000000e+00 : f32
    %24 = vector.broadcast %cst_18 : f32 to vector<8x32xf32>
    %25 = arith.maximumf %23, %24 : vector<8x32xf32>
    %c208 = arith.constant 208 : index
    %c0_19 = arith.constant 0 : index
    %26 = vector.load %arg4[%c208, %c0_19] : memref<800x128xf32, #tpu.memory_space<vmem>>, vector<32x16xf32>
    %cst_20 = arith.constant dense<0.000000e+00> : vector<8x16xf32>
    %27 = tpu.matmul %25, %26, %cst_20 {dimension_numbers = #tpu.dot_dimension_numbers<[1], [0], [0], [1], [0, 0, 1, 1], [], []>} : vector<8x32xf32>, vector<32x16xf32>, vector<8x16xf32> -> vector<8x16xf32>
    %c3 = arith.constant 3 : index
    %c0_21 = arith.constant 0 : index
    %28 = vector.load %arg5[%c3, %c0_21] : memref<16x128xf32, #tpu.memory_space<vmem>>, vector<1x16xf32>
    %29 = vector.broadcast %28 : vector<1x16xf32> to vector<8x16xf32>
    %30 = arith.addf %27, %29 : vector<8x16xf32>
    %c240 = arith.constant 240 : index
    %c0_22 = arith.constant 0 : index
    %31 = vector.load %arg4[%c240, %c0_22] : memref<800x128xf32, #tpu.memory_space<vmem>>, vector<32x16xf32>
    %cst_23 = arith.constant dense<0.000000e+00> : vector<8x16xf32>
    %32 = tpu.matmul %25, %31, %cst_23 {dimension_numbers = #tpu.dot_dimension_numbers<[1], [0], [0], [1], [0, 0, 1, 1], [], []>} : vector<8x32xf32>, vector<32x16xf32>, vector<8x16xf32> -> vector<8x16xf32>
    %c4 = arith.constant 4 : index
    %c0_24 = arith.constant 0 : index
    %33 = vector.load %arg5[%c4, %c0_24] : memref<16x128xf32, #tpu.memory_space<vmem>>, vector<1x16xf32>
    %34 = vector.broadcast %33 : vector<1x16xf32> to vector<8x16xf32>
    %35 = arith.addf %32, %34 : vector<8x16xf32>
    %cst_25 = arith.constant 0.000000e+00 : f32
    %36 = vector.broadcast %cst_25 : f32 to vector<8x16xf32>
    %37 = arith.subf %36, %35 : vector<8x16xf32>
    %38 = math.exp %37 : vector<8x16xf32>
    %cst_26 = arith.constant 1.000000e+00 : f32
    %39 = vector.broadcast %cst_26 : f32 to vector<8x16xf32>
    %40 = arith.addf %39, %38 : vector<8x16xf32>
    %cst_27 = arith.constant 1.000000e+00 : f32
    %41 = vector.broadcast %cst_27 : f32 to vector<8x16xf32>
    %42 = arith.divf %41, %40 : vector<8x16xf32>
    %cst_28 = arith.constant 0.899999976 : f32
    %43 = vector.broadcast %cst_28 : f32 to vector<8x16xf32>
    %44 = arith.mulf %43, %42 : vector<8x16xf32>
    %cst_29 = arith.constant 1.000000e-01 : f32
    %45 = vector.broadcast %cst_29 : f32 to vector<8x16xf32>
    %46 = arith.addf %45, %44 : vector<8x16xf32>
    %47 = math.absf %46 : vector<8x16xf32>
    %48 = arith.mulf %47, %2 : vector<8x16xf32>
    %49 = arith.addf %30, %48 : vector<8x16xf32>
    %c272 = arith.constant 272 : index
    %c0_30 = arith.constant 0 : index
    %50 = vector.load %arg4[%c272, %c0_30] : memref<800x128xf32, #tpu.memory_space<vmem>>, vector<128x64xf32>
    %cst_31 = arith.constant dense<0.000000e+00> : vector<8x64xf32>
    %51 = tpu.matmul %18, %50, %cst_31 {dimension_numbers = #tpu.dot_dimension_numbers<[1], [0], [0], [1], [0, 0, 1, 1], [], []>} : vector<8x128xf32>, vector<128x64xf32>, vector<8x64xf32> -> vector<8x64xf32>
    %c400 = arith.constant 400 : index
    %c0_32 = arith.constant 0 : index
    %52 = vector.load %arg4[%c400, %c0_32] : memref<800x128xf32, #tpu.memory_space<vmem>>, vector<16x64xf32>
    %cst_33 = arith.constant dense<0.000000e+00> : vector<8x64xf32>
    %53 = tpu.matmul %49, %52, %cst_33 {dimension_numbers = #tpu.dot_dimension_numbers<[1], [0], [0], [1], [0, 0, 1, 1], [], []>} : vector<8x16xf32>, vector<16x64xf32>, vector<8x64xf32> -> vector<8x64xf32>
    %54 = arith.addf %51, %53 : vector<8x64xf32>
    %c5 = arith.constant 5 : index
    %c0_34 = arith.constant 0 : index
    %55 = vector.load %arg5[%c5, %c0_34] : memref<16x128xf32, #tpu.memory_space<vmem>>, vector<1x64xf32>
    %56 = vector.broadcast %55 : vector<1x64xf32> to vector<8x64xf32>
    %57 = arith.addf %54, %56 : vector<8x64xf32>
    %cst_35 = arith.constant 0.000000e+00 : f32
    %58 = vector.broadcast %cst_35 : f32 to vector<8x64xf32>
    %59 = arith.maximumf %57, %58 : vector<8x64xf32>
    %c416 = arith.constant 416 : index
    %c0_36 = arith.constant 0 : index
    %60 = vector.load %arg4[%c416, %c0_36] : memref<800x128xf32, #tpu.memory_space<vmem>>, vector<64x64xf32>
    %cst_37 = arith.constant dense<0.000000e+00> : vector<8x64xf32>
    %61 = tpu.matmul %59, %60, %cst_37 {dimension_numbers = #tpu.dot_dimension_numbers<[1], [0], [0], [1], [0, 0, 1, 1], [], []>} : vector<8x64xf32>, vector<64x64xf32>, vector<8x64xf32> -> vector<8x64xf32>
    %c6 = arith.constant 6 : index
    %c0_38 = arith.constant 0 : index
    %62 = vector.load %arg5[%c6, %c0_38] : memref<16x128xf32, #tpu.memory_space<vmem>>, vector<1x64xf32>
    %63 = vector.broadcast %62 : vector<1x64xf32> to vector<8x64xf32>
    %64 = arith.addf %61, %63 : vector<8x64xf32>
    %cst_39 = arith.constant 0.000000e+00 : f32
    %65 = vector.broadcast %cst_39 : f32 to vector<8x64xf32>
    %66 = arith.maximumf %64, %65 : vector<8x64xf32>
    %c480 = arith.constant 480 : index
    %c0_40 = arith.constant 0 : index
    %67 = vector.load %arg4[%c480, %c0_40] : memref<800x128xf32, #tpu.memory_space<vmem>>, vector<64x64xf32>
    %cst_41 = arith.constant dense<0.000000e+00> : vector<8x64xf32>
    %68 = tpu.matmul %66, %67, %cst_41 {dimension_numbers = #tpu.dot_dimension_numbers<[1], [0], [0], [1], [0, 0, 1, 1], [], []>} : vector<8x64xf32>, vector<64x64xf32>, vector<8x64xf32> -> vector<8x64xf32>
    %c7 = arith.constant 7 : index
    %c0_42 = arith.constant 0 : index
    %69 = vector.load %arg5[%c7, %c0_42] : memref<16x128xf32, #tpu.memory_space<vmem>>, vector<1x64xf32>
    %70 = vector.broadcast %69 : vector<1x64xf32> to vector<8x64xf32>
    %71 = arith.addf %68, %70 : vector<8x64xf32>
    %cst_43 = arith.constant 0.000000e+00 : f32
    %72 = vector.broadcast %cst_43 : f32 to vector<8x64xf32>
    %73 = arith.maximumf %71, %72 : vector<8x64xf32>
    %c544 = arith.constant 544 : index
    %c0_44 = arith.constant 0 : index
    %74 = vector.load %arg4[%c544, %c0_44] : memref<800x128xf32, #tpu.memory_space<vmem>>, vector<64x64xf32>
    %cst_45 = arith.constant dense<0.000000e+00> : vector<8x64xf32>
    %75 = tpu.matmul %73, %74, %cst_45 {dimension_numbers = #tpu.dot_dimension_numbers<[1], [0], [0], [1], [0, 0, 1, 1], [], []>} : vector<8x64xf32>, vector<64x64xf32>, vector<8x64xf32> -> vector<8x64xf32>
    %c8_46 = arith.constant 8 : index
    %c0_47 = arith.constant 0 : index
    %76 = vector.load %arg5[%c8_46, %c0_47] : memref<16x128xf32, #tpu.memory_space<vmem>>, vector<1x64xf32>
    %77 = vector.broadcast %76 : vector<1x64xf32> to vector<8x64xf32>
    %78 = arith.addf %75, %77 : vector<8x64xf32>
    %cst_48 = arith.constant 0.000000e+00 : f32
    %79 = vector.broadcast %cst_48 : f32 to vector<8x64xf32>
    %80 = arith.maximumf %78, %79 : vector<8x64xf32>
    %c608 = arith.constant 608 : index
    %c0_49 = arith.constant 0 : index
    %81 = vector.load %arg4[%c608, %c0_49] : memref<800x128xf32, #tpu.memory_space<vmem>>, vector<64x64xf32>
    %cst_50 = arith.constant dense<0.000000e+00> : vector<8x64xf32>
    %82 = tpu.matmul %80, %81, %cst_50 {dimension_numbers = #tpu.dot_dimension_numbers<[1], [0], [0], [1], [0, 0, 1, 1], [], []>} : vector<8x64xf32>, vector<64x64xf32>, vector<8x64xf32> -> vector<8x64xf32>
    %c9 = arith.constant 9 : index
    %c0_51 = arith.constant 0 : index
    %83 = vector.load %arg5[%c9, %c0_51] : memref<16x128xf32, #tpu.memory_space<vmem>>, vector<1x64xf32>
    %84 = vector.broadcast %83 : vector<1x64xf32> to vector<8x64xf32>
    %85 = arith.addf %82, %84 : vector<8x64xf32>
    %cst_52 = arith.constant 0.000000e+00 : f32
    %86 = vector.broadcast %cst_52 : f32 to vector<8x64xf32>
    %87 = arith.maximumf %85, %86 : vector<8x64xf32>
    %c672 = arith.constant 672 : index
    %c0_53 = arith.constant 0 : index
    %88 = vector.load %arg4[%c672, %c0_53] : memref<800x128xf32, #tpu.memory_space<vmem>>, vector<64x64xf32>
    %cst_54 = arith.constant dense<0.000000e+00> : vector<8x64xf32>
    %89 = tpu.matmul %87, %88, %cst_54 {dimension_numbers = #tpu.dot_dimension_numbers<[1], [0], [0], [1], [0, 0, 1, 1], [], []>} : vector<8x64xf32>, vector<64x64xf32>, vector<8x64xf32> -> vector<8x64xf32>
    %c10 = arith.constant 10 : index
    %c0_55 = arith.constant 0 : index
    %90 = vector.load %arg5[%c10, %c0_55] : memref<16x128xf32, #tpu.memory_space<vmem>>, vector<1x64xf32>
    %91 = vector.broadcast %90 : vector<1x64xf32> to vector<8x64xf32>
    %92 = arith.addf %89, %91 : vector<8x64xf32>
    %cst_56 = arith.constant 0.000000e+00 : f32
    %93 = vector.broadcast %cst_56 : f32 to vector<8x64xf32>
    %94 = arith.maximumf %92, %93 : vector<8x64xf32>
    %c736 = arith.constant 736 : index
    %c0_57 = arith.constant 0 : index
    %95 = vector.load %arg4[%c736, %c0_57] : memref<800x128xf32, #tpu.memory_space<vmem>>, vector<64x12xf32>
    %cst_58 = arith.constant dense<0.000000e+00> : vector<8x12xf32>
    %96 = tpu.matmul %94, %95, %cst_58 {dimension_numbers = #tpu.dot_dimension_numbers<[1], [0], [0], [1], [0, 0, 1, 1], [], []>} : vector<8x64xf32>, vector<64x12xf32>, vector<8x12xf32> -> vector<8x12xf32>
    %c11 = arith.constant 11 : index
    %c0_59 = arith.constant 0 : index
    %97 = vector.load %arg5[%c11, %c0_59] : memref<16x128xf32, #tpu.memory_space<vmem>>, vector<1x12xf32>
    %98 = vector.broadcast %97 : vector<1x12xf32> to vector<8x12xf32>
    %99 = arith.addf %96, %98 : vector<8x12xf32>
    %100 = tpu.iota {dimensions = array<i32: 1>} : vector<8x12xi32>
    %c4_i32 = arith.constant 4 : i32
    %101 = vector.broadcast %c4_i32 : i32 to vector<8x12xi32>
    %102 = arith.cmpi slt, %100, %101 : vector<8x12xi32>
    %c8_i32 = arith.constant 8 : i32
    %103 = vector.broadcast %c8_i32 : i32 to vector<8x12xi32>
    %104 = arith.cmpi slt, %100, %103 : vector<8x12xi32>
    %cst_60 = arith.constant 0.000000e+00 : f32
    %105 = vector.broadcast %cst_60 : f32 to vector<8x12xf32>
    %106 = arith.maximumf %99, %105 : vector<8x12xf32>
    %107 = math.absf %99 : vector<8x12xf32>
    %cst_61 = arith.constant 0.000000e+00 : f32
    %108 = vector.broadcast %cst_61 : f32 to vector<8x12xf32>
    %109 = arith.subf %108, %107 : vector<8x12xf32>
    %110 = math.exp %109 : vector<8x12xf32>
    %cst_62 = arith.constant 1.000000e+00 : f32
    %111 = vector.broadcast %cst_62 : f32 to vector<8x12xf32>
    %112 = arith.addf %111, %110 : vector<8x12xf32>
    %113 = math.log %112 : vector<8x12xf32>
    %114 = arith.addf %106, %113 : vector<8x12xf32>
    %cst_63 = arith.constant 0.000000e+00 : f32
    %115 = vector.broadcast %cst_63 : f32 to vector<8x12xf32>
    %116 = arith.subf %115, %99 : vector<8x12xf32>
    %117 = math.exp %116 : vector<8x12xf32>
    %cst_64 = arith.constant 1.000000e+00 : f32
    %118 = vector.broadcast %cst_64 : f32 to vector<8x12xf32>
    %119 = arith.addf %118, %117 : vector<8x12xf32>
    %cst_65 = arith.constant 1.000000e+00 : f32
    %120 = vector.broadcast %cst_65 : f32 to vector<8x12xf32>
    %121 = arith.divf %120, %119 : vector<8x12xf32>
    %122 = arith.select %104, %114, %121 : vector<8x12xi1>, vector<8x12xf32>
    %123 = arith.select %102, %99, %122 : vector<8x12xi1>, vector<8x12xf32>
    %c0_66 = arith.constant 0 : index
    %c0_67 = arith.constant 0 : index
    %124 = vector.load %arg6[%c0_66, %c0_67] : memref<8x12xf32, #tpu.memory_space<vmem>>, vector<8x12xf32>
    tpu.vector_store %arg6[%c0_66, %c0_67], %123 {strides = array<i32>} : memref<8x12xf32, #tpu.memory_space<vmem>>, vector<8x12xf32>,
    return
  }
  func.func @transform_0(%arg0: i32) -> (i32, i32) {
    %c0_i32 = arith.constant 0 : i32
    %c0_i32_0 = arith.constant 0 : i32
    return %arg0, %c0_i32 : i32, i32
  }
  func.func @transform_1(%arg0: i32) -> (i32, i32) {
    %c0_i32 = arith.constant 0 : i32
    %c0_i32_0 = arith.constant 0 : i32
    return %arg0, %c0_i32 : i32, i32
  }
  func.func @transform_2(%arg0: i32) -> (i32, i32) {
    %c0_i32 = arith.constant 0 : i32
    %c0_i32_0 = arith.constant 0 : i32
    return %arg0, %c0_i32 : i32, i32
  }
  func.func @transform_3(%arg0: i32) -> (i32, i32) {
    %c0_i32 = arith.constant 0 : i32
    %c0_i32_0 = arith.constant 0 : i32
    %c0_i32_1 = arith.constant 0 : i32
    return %c0_i32, %c0_i32_0 : i32, i32
  }
  func.func @transform_4(%arg0: i32) -> (i32, i32) {
    %c0_i32 = arith.constant 0 : i32
    %c0_i32_0 = arith.constant 0 : i32
    %c0_i32_1 = arith.constant 0 : i32
    return %c0_i32, %c0_i32_0 : i32, i32
  }
  func.func @transform_5(%arg0: i32) -> (i32, i32) {
    %c0_i32 = arith.constant 0 : i32
    %c0_i32_0 = arith.constant 0 : i32
    return %arg0, %c0_i32 : i32, i32
  }
}

</mosaic_0001>

<llo_original>
// kernel: tpu_custom_call.1
$region0: #{tpu_custom_call.1}
  #allocation0 [shape = 'u32[]', space=smem, size = 0x4, offset = 0x4, fixed_abs, tag = 'smem constant byte address 0x4 - core index']
  #allocation1 [shape = 'u32[144,128]{1,0:T(1,128)}', space=vmem, size = 0x12000, scoped, tag = 'internal scratch']
  %s0 = inlined_call_operand.vmem [shape: f32[8,4], index: 0, kind: input, shape index: {}]
  %s1 = inlined_call_operand.vmem [shape: f32[8,4], index: 1, kind: input, shape index: {}]
  %s2 = inlined_call_operand.vmem [shape: f32[8,16], index: 2, kind: input, shape index: {}]
  %s3 = inlined_call_operand.hbm [shape: f32[800,128], index: 3, kind: input, shape index: {}]
  %s4 = inlined_call_operand.vmem [shape: f32[16,128], index: 4, kind: input, shape index: {}]
  %s5 = inlined_call_operand.hbm [shape: f32[8,12], index: 5, kind: output, shape index: {}]
  %s6 = sld [smem:[#allocation0]]
  $region34: #{tpu_custom_call.1} parent=0
    _
  %s8 = ssub.s32 1, %s6
  %s9 = scalar_select 0, %s8, %s6
  $region1: #{tpu_custom_call.1} parent=0
    #allocation2 [shape = 'u8[409600]{0}', space=vmem, size = 0x64000, scoped, tag = 'input window, operand 3, single buffered']
    #allocation3 [shape = 's32[1]{0}', space=sflag, size = 0x4, scoped, tag = 'scoped memory for tpu_custom_call.1']
    #allocation4 [shape = 's32[1]{0}', space=sflag, size = 0x4, scoped, tag = 'scoped memory for tpu_custom_call.1']
    #allocation5 [shape = 'u8[4096]{0}', space=vmem, size = 0x1000, scoped, tag = 'output window, operand 0, single buffered']
    %10 = vsyncpa [#allocation3], 0
    %11 = vsyncpa [#allocation4], 0
    // Predicated region
    $region2: #{tpu_custom_call.1} parent=1 // pred_check
      _
    $region3: #{tpu_custom_call.1} parent=1 // pred_check_branch
      %13 = sbr.rel (0) target = $region5
    $region4: #{tpu_custom_call.1} parent=1 // pred_region
      _
    $region5: #{tpu_custom_call.1} parent=1 // pred_fallthru
      _
    // Predicated region
    $region6: #{tpu_custom_call.1} parent=1 // pred_check
      _
    $region7: #{tpu_custom_call.1} parent=1 // pred_check_branch
      %15 = sbr.rel (0) target = $region9
    $region8: #{tpu_custom_call.1} parent=1 // pred_region
      _
    $region9: #{tpu_custom_call.1} parent=1 // pred_fallthru
      _
    // Predicated region
    $region10: #{tpu_custom_call.1} parent=1 // pred_check
      _
    $region11: #{tpu_custom_call.1} parent=1 // pred_check_branch
      %17 = sbr.rel (0) target = $region13
    $region12: #{tpu_custom_call.1} parent=1 // pred_region
      _
    $region13: #{tpu_custom_call.1} parent=1 // pred_fallthru
      _
    // Predicated region
    $region14: #{tpu_custom_call.1} parent=1 // pred_check
      _
    $region15: #{tpu_custom_call.1} parent=1 // pred_check_branch
      %19 = sbr.rel (0) target = $region17
    $region16: #{tpu_custom_call.1} parent=1 // pred_region
      %s21 = ssub.s32 12800, 12800
      %22 = vsyncadd [#allocation3], %s21
      %s23 = sshll.u32 [#allocation2], 4
      %s24 = int_to_ptr.vmem [resolvable:$true] %s23
      %29 = dma.hbm_to_vmem [thread:$0]  %s3, 12800, %s24, [#allocation3], 128, 128, 8
    $region17: #{tpu_custom_call.1} parent=1 // pred_fallthru
      _
    // Predicated region
    $region18: #{tpu_custom_call.1} parent=1 // pred_check
      _
    $region19: #{tpu_custom_call.1} parent=1 // pred_check_branch
      %31 = sbr.rel (0) target = $region21
    $region20: #{tpu_custom_call.1} parent=1 // pred_region
      _
    $region21: #{tpu_custom_call.1} parent=1 // pred_fallthru
      _
    // Predicated region
    $region22: #{tpu_custom_call.1} parent=1 // pred_check
      _
    $region23: #{tpu_custom_call.1} parent=1 // pred_check_branch
      %33 = sbr.rel (0) target = $region25
    $region24: #{tpu_custom_call.1} parent=1 // pred_region
      %34 = dma.done [#allocation3], 12800
    $region25: #{tpu_custom_call.1} parent=1 // pred_fallthru
      _
    %v35 = vld [vmem:[%s0] sm:$0xff]
    %v36 = vld [vmem:[%s1] sm:$0xff]
    %v37 = vld [vmem:[%s2] sm:$0xff]
    %v38 = vmul.f32 %v35, %v36
    %v39 = vld [vmem:[#allocation2] sm:$0xf]
    %v40 = vld [vmem:[#allocation2 + $0x8] sm:$0xf]
    %vm41 = vcmask 31744
    %v43 = vsel %vm41, %v36, 0
    %vm45 = vcmask 1043456
    %v47 = vsel %vm45, %v40, 0
    %49 = vmatprep.subr.mxu0 0.0
    %50 = vmatpush1.msra.mxu0 %v47
    %51 = vmatprep.subr.mxu0 0.0
    %52 = vmatpush1.msra.mxu0 0.0
    %53 = vmatprep.subr.mxu0 0.0
    %54 = vmatpush1.msra.mxu0 0.0
    %55 = vmatprep.subr.mxu0 0.0
    %56 = vmatpush1.msra.mxu0 0.0
    %57 = vmatprep.subr.mxu0 0.0
    %58 = vmatpush1.msra.mxu0 0.0
    %59 = vmatprep.subr.mxu0 0.0
    %60 = vmatpush1.msra.mxu0 0.0
    %61 = vmatprep.subr.mxu0 0.0
    %62 = vmatpush1.msra.mxu0 0.0
    %63 = vmatprep.subr.mxu0 0.0
    %64 = vmatpush1.msra.mxu0 0.0
    %65 = vmatprep.subr.mxu0 0.0
    %66 = vmatpush1.msra.mxu0 0.0
    %67 = vmatprep.subr.mxu0 0.0
    %68 = vmatpush1.msra.mxu0 0.0
    %69 = vmatprep.subr.mxu0 0.0
    %70 = vmatpush1.msra.mxu0 0.0
    %71 = vmatprep.subr.mxu0 0.0
    %72 = vmatpush1.msra.mxu0 0.0
    %73 = vmatprep.subr.mxu0 0.0
    %74 = vmatpush1.msra.mxu0 0.0
    %75 = vmatprep.subr.mxu0 0.0
    %76 = vmatpush1.msra.mxu0 0.0
    %77 = vmatprep.subr.mxu0 0.0
    %78 = vmatpush1.msra.mxu0 0.0
    %79 = vmatprep.subr.mxu0 0.0
    %80 = vmatpush1.msra.mxu0 0.0
    %81 = vmatprep.subr.mxu0 0.0
    %82 = vmatpush1.msra.mxu0 0.0
    %83 = vmatprep.subr.mxu0 0.0
    %84 = vmatpush1.msra.mxu0 0.0
    %85 = vmatprep.subr.mxu0 0.0
    %86 = vmatpush1.msra.mxu0 0.0
    %87 = vmatprep.subr.mxu0 0.0
    %88 = vmatpush1.msra.mxu0 0.0
    %89 = vmatprep.subr.mxu0 0.0
    %90 = vmatpush1.msra.mxu0 0.0
    %91 = vmatprep.subr.mxu0 0.0
    %92 = vmatpush1.msra.mxu0 0.0
    %93 = vmatprep.subr.mxu0 0.0
    %94 = vmatpush1.msra.mxu0 0.0
    %95 = vmatprep.subr.mxu0 0.0
    %96 = vmatpush1.msra.mxu0 0.0
    %97 = vmatprep.subr.mxu0 0.0
    %98 = vmatpush1.msra.mxu0 0.0
    %99 = vmatprep.subr.mxu0 0.0
    %100 = vmatpush1.msra.mxu0 0.0
    %101 = vmatprep.subr.mxu0 0.0
    %102 = vmatpush1.msra.mxu0 0.0
    %103 = vmatprep.subr.mxu0 0.0
    %104 = vmatpush1.msra.mxu0 0.0
    %105 = vmatprep.subr.mxu0 0.0
    %106 = vmatpush1.msra.mxu0 0.0
    %107 = vmatprep.subr.mxu0 0.0
    %108 = vmatpush1.msra.mxu0 0.0
    %109 = vmatprep.subr.mxu0 0.0
    %110 = vmatpush1.msra.mxu0 0.0
    %111 = vmatprep.subr.mxu0 0.0
    %112 = vmatpush1.msra.mxu0 0.0
    %113 = vmatprep.mubr.f32.mxu0 0.0
    %114 = vmatmul.mubr.f32.gmra.mrb[0].mxu0 %v43
    %v115 = vpop.f32.mrb[0].mxu0
    %v116 = vadd.f32 0.0, %v115
    %v117 = vpop.f32.mrb[0].mxu0
    %118 = vdwg.mxu0
    %v120 = vsel %vm41, %v38, 0
    %v123 = vsel %vm45, %v39, 0
    %125 = vmatprep.subr.mxu0 0.0
    %126 = vmatpush1.msra.mxu0 %v123
    %127 = vmatprep.subr.mxu0 0.0
    %128 = vmatpush1.msra.mxu0 0.0
    %129 = vmatprep.subr.mxu0 0.0
    %130 = vmatpush1.msra.mxu0 0.0
    %131 = vmatprep.subr.mxu0 0.0
    %132 = vmatpush1.msra.mxu0 0.0
    %133 = vmatprep.subr.mxu0 0.0
    %134 = vmatpush1.msra.mxu0 0.0
    %135 = vmatprep.subr.mxu0 0.0
    %136 = vmatpush1.msra.mxu0 0.0
    %137 = vmatprep.subr.mxu0 0.0
    %138 = vmatpush1.msra.mxu0 0.0
    %139 = vmatprep.subr.mxu0 0.0
    %140 = vmatpush1.msra.mxu0 0.0
    %141 = vmatprep.subr.mxu0 0.0
    %142 = vmatpush1.msra.mxu0 0.0
    %143 = vmatprep.subr.mxu0 0.0
    %144 = vmatpush1.msra.mxu0 0.0
    %145 = vmatprep.subr.mxu0 0.0
    %146 = vmatpush1.msra.mxu0 0.0
    %147 = vmatprep.subr.mxu0 0.0
    %148 = vmatpush1.msra.mxu0 0.0
    %149 = vmatprep.subr.mxu0 0.0
    %150 = vmatpush1.msra.mxu0 0.0
    %151 = vmatprep.subr.mxu0 0.0
    %152 = vmatpush1.msra.mxu0 0.0
    %153 = vmatprep.subr.mxu0 0.0
    %154 = vmatpush1.msra.mxu0 0.0
    %155 = vmatprep.subr.mxu0 0.0
    %156 = vmatpush1.msra.mxu0 0.0
    %157 = vmatprep.subr.mxu0 0.0
    %158 = vmatpush1.msra.mxu0 0.0
    %159 = vmatprep.subr.mxu0 0.0
    %160 = vmatpush1.msra.mxu0 0.0
    %161 = vmatprep.subr.mxu0 0.0
    %162 = vmatpush1.msra.mxu0 0.0
    %163 = vmatprep.subr.mxu0 0.0
    %164 = vmatpush1.msra.mxu0 0.0
    %165 = vmatprep.subr.mxu0 0.0
    %166 = vmatpush1.msra.mxu0 0.0
    %167 = vmatprep.subr.mxu0 0.0
    %168 = vmatpush1.msra.mxu0 0.0
    %169 = vmatprep.subr.mxu0 0.0
    %170 = vmatpush1.msra.mxu0 0.0
    %171 = vmatprep.subr.mxu0 0.0
    %172 = vmatpush1.msra.mxu0 0.0
    %173 = vmatprep.subr.mxu0 0.0
    %174 = vmatpush1.msra.mxu0 0.0
    %175 = vmatprep.subr.mxu0 0.0
    %176 = vmatpush1.msra.mxu0 0.0
    %177 = vmatprep.subr.mxu0 0.0
    %178 = vmatpush1.msra.mxu0 0.0
    %179 = vmatprep.subr.mxu0 0.0
    %180 = vmatpush1.msra.mxu0 0.0
    %181 = vmatprep.subr.mxu0 0.0
    %182 = vmatpush1.msra.mxu0 0.0
    %183 = vmatprep.subr.mxu0 0.0
    %184 = vmatpush1.msra.mxu0 0.0
    %185 = vmatprep.subr.mxu0 0.0
    %186 = vmatpush1.msra.mxu0 0.0
    %187 = vmatprep.subr.mxu0 0.0
    %188 = vmatpush1.msra.mxu0 0.0
    %189 = vmatprep.mubr.f32.mxu0 0.0
    %190 = vmatmul.mubr.f32.gmra.mrb[0].mxu0 %v120
    %v191 = vpop.f32.mrb[0].mxu0
    %v192 = vadd.f32 %v116, %v191
    %v193 = vpop.f32.mrb[0].mxu0
    %194 = vdwg.mxu0
    %v195 = vld [vmem:[%s4] sm:$0x1]
    %v196 = vlaneseq
    %v197 = vshrl.u32 %v196, 7
    %v198 = vsub.s32 0, %v197
    %v199 = vrot.slane %v195, %v198
    %v200 = vadd.f32 %v192, %v199
    %v201 = vmax.f32 %v200, 0.0
    %v202 = vld [vmem:[#allocation2 + $0x10] sm:$0xff]
    %v203 = vld [vmem:[#allocation2 + $0x18] sm:$0xff]
    %v204 = vld [vmem:[#allocation2 + $0x20] sm:$0xff]
    %v205 = vld [vmem:[#allocation2 + $0x28] sm:$0xff]
    %v206 = vld [vmem:[#allocation2 + $0x30] sm:$0xff]
    %v207 = vld [vmem:[#allocation2 + $0x38] sm:$0xff]
    %v208 = vld [vmem:[#allocation2 + $0x40] sm:$0xff]
    %v209 = vld [vmem:[#allocation2 + $0x48] sm:$0xff]
    %v210 = vld [vmem:[%s4 + $0x1] sm:$0x1]
    %v211 = vlaneseq
    %v212 = vshrl.u32 %v211, 7
    %v213 = vsub.s32 0, %v212
    %v214 = vrot.slane %v210, %v213
    %vm215 = vcmask 523264
    %v217 = vsel %vm215, %v201, 0
    %219 = vmatprep.subr.mxu0 0.0
    %220 = vmatpush1.msra.mxu0 %v202
    %221 = vmatprep.subr.mxu0 0.0
    %222 = vmatpush1.msra.mxu0 %v203
    %223 = vmatprep.subr.mxu0 0.0
    %224 = vmatpush1.msra.mxu0 %v204
    %225 = vmatprep.subr.mxu0 0.0
    %226 = vmatpush1.msra.mxu0 %v205
    %227 = vmatprep.subr.mxu0 0.0
    %228 = vmatpush1.msra.mxu0 %v206
    %229 = vmatprep.subr.mxu0 0.0
    %230 = vmatpush1.msra.mxu0 %v207
    %231 = vmatprep.subr.mxu0 0.0
    %232 = vmatpush1.msra.mxu0 %v208
    %233 = vmatprep.subr.mxu0 0.0
    %234 = vmatpush1.msra.mxu0 %v209
    %235 = vmatprep.subr.mxu0 0.0
    %236 = vmatpush1.msra.mxu0 0.0
    %237 = vmatprep.subr.mxu0 0.0
    %238 = vmatpush1.msra.mxu0 0.0
    %239 = vmatprep.subr.mxu0 0.0
    %240 = vmatpush1.msra.mxu0 0.0
    %241 = vmatprep.subr.mxu0 0.0
    %242 = vmatpush1.msra.mxu0 0.0
    %243 = vmatprep.subr.mxu0 0.0
    %244 = vmatpush1.msra.mxu0 0.0
    %245 = vmatprep.subr.mxu0 0.0
    %246 = vmatpush1.msra.mxu0 0.0
    %247 = vmatprep.subr.mxu0 0.0
    %248 = vmatpush1.msra.mxu0 0.0
    %249 = vmatprep.subr.mxu0 0.0
    %250 = vmatpush1.msra.mxu0 0.0
    %251 = vmatprep.subr.mxu0 0.0
    %252 = vmatpush1.msra.mxu0 0.0
    %253 = vmatprep.subr.mxu0 0.0
    %254 = vmatpush1.msra.mxu0 0.0
    %255 = vmatprep.subr.mxu0 0.0
    %256 = vmatpush1.msra.mxu0 0.0
    %257 = vmatprep.subr.mxu0 0.0
    %258 = vmatpush1.msra.mxu0 0.0
    %259 = vmatprep.subr.mxu0 0.0
    %260 = vmatpush1.msra.mxu0 0.0
    %261 = vmatprep.subr.mxu0 0.0
    %262 = vmatpush1.msra.mxu0 0.0
    %263 = vmatprep.subr.mxu0 0.0
    %264 = vmatpush1.msra.mxu0 0.0
    %265 = vmatprep.subr.mxu0 0.0
    %266 = vmatpush1.msra.mxu0 0.0
    %267 = vmatprep.subr.mxu0 0.0
    %268 = vmatpush1.msra.mxu0 0.0
    %269 = vmatprep.subr.mxu0 0.0
    %270 = vmatpush1.msra.mxu0 0.0
    %271 = vmatprep.subr.mxu0 0.0
    %272 = vmatpush1.msra.mxu0 0.0
    %273 = vmatprep.subr.mxu0 0.0
    %274 = vmatpush1.msra.mxu0 0.0
    %275 = vmatprep.subr.mxu0 0.0
    %276 = vmatpush1.msra.mxu0 0.0
    %277 = vmatprep.subr.mxu0 0.0
    %278 = vmatpush1.msra.mxu0 0.0
    %279 = vmatprep.subr.mxu0 0.0
    %280 = vmatpush1.msra.mxu0 0.0
    %281 = vmatprep.subr.mxu0 0.0
    %282 = vmatpush1.msra.mxu0 0.0
    %283 = vmatprep.mubr.f32.mxu0 0.0
    %284 = vmatmul.mubr.f32.gmra.mrb[0].mxu0 %v217
    %v285 = vpop.f32.mrb[0].mxu0
    %v286 = vadd.f32 %v214, %v285
    %v287 = vpop.f32.mrb[0].mxu0
    %288 = vdwg.mxu0
    %v289 = vld [vmem:[#allocation2 + $0x50] sm:$0xff]
    %v290 = vld [vmem:[#allocation2 + $0x58] sm:$0xff]
    %v291 = vld [vmem:[#allocation2 + $0x60] sm:$0xff]
    %v292 = vld [vmem:[#allocation2 + $0x68] sm:$0xff]
    %v293 = vld [vmem:[#allocation2 + $0x70] sm:$0xff]
    %v294 = vld [vmem:[#allocation2 + $0x78] sm:$0xff]
    %v295 = vld [vmem:[#allocation2 + $0x80] sm:$0xff]
    %v296 = vld [vmem:[#allocation2 + $0x88] sm:$0xff]
    %v297 = vld [vmem:[#allocation2 + $0x90] sm:$0xff]
    %v298 = vld [vmem:[#allocation2 + $0x98] sm:$0xff]
    %v299 = vld [vmem:[#allocation2 + $0xa0] sm:$0xff]
    %v300 = vld [vmem:[#allocation2 + $0xa8] sm:$0xff]
    %v301 = vld [vmem:[#allocation2 + $0xb0] sm:$0xff]
    %v302 = vld [vmem:[#allocation2 + $0xb8] sm:$0xff]
    %v303 = vld [vmem:[#allocation2 + $0xc0] sm:$0xff]
    %v304 = vld [vmem:[#allocation2 + $0xc8] sm:$0xff]
    %v305 = vld [vmem:[%s4 + $0x2] sm:$0x1]
    %v306 = vlaneseq
    %v307 = vshrl.u32 %v306, 7
    %v308 = vsub.s32 0, %v307
    %v309 = vrot.slane %v305, %v308
    %310 = vmatprep.subr.mxu0 0.0
    %311 = vmatpush1.msra.mxu0 %v289
    %312 = vmatprep.subr.mxu0 0.0
    %313 = vmatpush1.msra.mxu0 %v290
    %314 = vmatprep.subr.mxu0 0.0
    %315 = vmatpush1.msra.mxu0 %v291
    %316 = vmatprep.subr.mxu0 0.0
    %317 = vmatpush1.msra.mxu0 %v292
    %318 = vmatprep.subr.mxu0 0.0
    %319 = vmatpush1.msra.mxu0 %v293
    %320 = vmatprep.subr.mxu0 0.0
    %321 = vmatpush1.msra.mxu0 %v294
    %322 = vmatprep.subr.mxu0 0.0
    %323 = vmatpush1.msra.mxu0 %v295
    %324 = vmatprep.subr.mxu0 0.0
    %325 = vmatpush1.msra.mxu0 %v296
    %326 = vmatprep.subr.mxu0 0.0
    %327 = vmatpush1.msra.mxu0 %v297
    %328 = vmatprep.subr.mxu0 0.0
    %329 = vmatpush1.msra.mxu0 %v298
    %330 = vmatprep.subr.mxu0 0.0
    %331 = vmatpush1.msra.mxu0 %v299
    %332 = vmatprep.subr.mxu0 0.0
    %333 = vmatpush1.msra.mxu0 %v300
    %334 = vmatprep.subr.mxu0 0.0
    %335 = vmatpush1.msra.mxu0 %v301
    %336 = vmatprep.subr.mxu0 0.0
    %337 = vmatpush1.msra.mxu0 %v302
    %338 = vmatprep.subr.mxu0 0.0
    %339 = vmatpush1.msra.mxu0 %v303
    %340 = vmatprep.subr.mxu0 0.0
    %341 = vmatpush1.msra.mxu0 %v304
    %342 = vmatprep.subr.mxu0 0.0
    %343 = vmatpush1.msra.mxu0 0.0
    %344 = vmatprep.subr.mxu0 0.0
    %345 = vmatpush1.msra.mxu0 0.0
    %346 = vmatprep.subr.mxu0 0.0
    %347 = vmatpush1.msra.mxu0 0.0
    %348 = vmatprep.subr.mxu0 0.0
    %349 = vmatpush1.msra.mxu0 0.0
    %350 = vmatprep.subr.mxu0 0.0
    %351 = vmatpush1.msra.mxu0 0.0
    %352 = vmatprep.subr.mxu0 0.0
    %353 = vmatpush1.msra.mxu0 0.0
    %354 = vmatprep.subr.mxu0 0.0
    %355 = vmatpush1.msra.mxu0 0.0
    %356 = vmatprep.subr.mxu0 0.0
    %357 = vmatpush1.msra.mxu0 0.0
    %358 = vmatprep.subr.mxu0 0.0
    %359 = vmatpush1.msra.mxu0 0.0
    %360 = vmatprep.subr.mxu0 0.0
    %361 = vmatpush1.msra.mxu0 0.0
    %362 = vmatprep.subr.mxu0 0.0
    %363 = vmatpush1.msra.mxu0 0.0
    %364 = vmatprep.subr.mxu0 0.0
    %365 = vmatpush1.msra.mxu0 0.0
    %366 = vmatprep.subr.mxu0 0.0
    %367 = vmatpush1.msra.mxu0 0.0
    %368 = vmatprep.subr.mxu0 0.0
    %369 = vmatpush1.msra.mxu0 0.0
    %370 = vmatprep.subr.mxu0 0.0
    %371 = vmatpush1.msra.mxu0 0.0
    %372 = vmatprep.subr.mxu0 0.0
    %373 = vmatpush1.msra.mxu0 0.0
    %374 = vmatprep.mubr.f32.mxu0 0.0
    %375 = vmatmul.mubr.f32.gmra.mrb[0].mxu0 %v286
    %v376 = vpop.f32.mrb[0].mxu0
    %v377 = vadd.f32 %v309, %v376
    %v378 = vpop.f32.mrb[0].mxu0
    %379 = vdwg.mxu0
    %v380 = vmax.f32 %v377, 0.0
    %v381 = vld [vmem:[#allocation2 + $0xd0] sm:$0xff]
    %v382 = vld [vmem:[#allocation2 + $0xd8] sm:$0xff]
    %v383 = vld [vmem:[#allocation2 + $0xe0] sm:$0xff]
    %v384 = vld [vmem:[#allocation2 + $0xe8] sm:$0xff]
    %v385 = vld [vmem:[%s4 + $0x3] sm:$0x1]
    %v386 = vlaneseq
    %v387 = vshrl.u32 %v386, 7
    %v388 = vsub.s32 0, %v387
    %v389 = vrot.slane %v385, %v388
    %vm390 = vcmask 261120
    %v392 = vsel %vm390, %v380, 0
    %394 = vmatprep.subr.mxu0 0.0
    %395 = vmatpush1.msra.mxu0 %v381
    %396 = vmatprep.subr.mxu0 0.0
    %397 = vmatpush1.msra.mxu0 %v382
    %398 = vmatprep.subr.mxu0 0.0
    %399 = vmatpush1.msra.mxu0 %v383
    %400 = vmatprep.subr.mxu0 0.0
    %401 = vmatpush1.msra.mxu0 %v384
    %402 = vmatprep.subr.mxu0 0.0
    %403 = vmatpush1.msra.mxu0 0.0
    %404 = vmatprep.subr.mxu0 0.0
    %405 = vmatpush1.msra.mxu0 0.0
    %406 = vmatprep.subr.mxu0 0.0
    %407 = vmatpush1.msra.mxu0 0.0
    %408 = vmatprep.subr.mxu0 0.0
    %409 = vmatpush1.msra.mxu0 0.0
    %410 = vmatprep.subr.mxu0 0.0
    %411 = vmatpush1.msra.mxu0 0.0
    %412 = vmatprep.subr.mxu0 0.0
    %413 = vmatpush1.msra.mxu0 0.0
    %414 = vmatprep.subr.mxu0 0.0
    %415 = vmatpush1.msra.mxu0 0.0
    %416 = vmatprep.subr.mxu0 0.0
    %417 = vmatpush1.msra.mxu0 0.0
    %418 = vmatprep.subr.mxu0 0.0
    %419 = vmatpush1.msra.mxu0 0.0
    %420 = vmatprep.subr.mxu0 0.0
    %421 = vmatpush1.msra.mxu0 0.0
    %422 = vmatprep.subr.mxu0 0.0
    %423 = vmatpush1.msra.mxu0 0.0
    %424 = vmatprep.subr.mxu0 0.0
    %425 = vmatpush1.msra.mxu0 0.0
    %426 = vmatprep.subr.mxu0 0.0
    %427 = vmatpush1.msra.mxu0 0.0
    %428 = vmatprep.subr.mxu0 0.0
    %429 = vmatpush1.msra.mxu0 0.0
    %430 = vmatprep.subr.mxu0 0.0
    %431 = vmatpush1.msra.mxu0 0.0
    %432 = vmatprep.subr.mxu0 0.0
    %433 = vmatpush1.msra.mxu0 0.0
    %434 = vmatprep.subr.mxu0 0.0
    %435 = vmatpush1.msra.mxu0 0.0
    %436 = vmatprep.subr.mxu0 0.0
    %437 = vmatpush1.msra.mxu0 0.0
    %438 = vmatprep.subr.mxu0 0.0
    %439 = vmatpush1.msra.mxu0 0.0
    %440 = vmatprep.subr.mxu0 0.0
    %441 = vmatpush1.msra.mxu0 0.0
    %442 = vmatprep.subr.mxu0 0.0
    %443 = vmatpush1.msra.mxu0 0.0
    %444 = vmatprep.subr.mxu0 0.0
    %445 = vmatpush1.msra.mxu0 0.0
    %446 = vmatprep.subr.mxu0 0.0
    %447 = vmatpush1.msra.mxu0 0.0
    %448 = vmatprep.subr.mxu0 0.0
    %449 = vmatpush1.msra.mxu0 0.0
    %450 = vmatprep.subr.mxu0 0.0
    %451 = vmatpush1.msra.mxu0 0.0
    %452 = vmatprep.subr.mxu0 0.0
    %453 = vmatpush1.msra.mxu0 0.0
    %454 = vmatprep.subr.mxu0 0.0
    %455 = vmatpush1.msra.mxu0 0.0
    %456 = vmatprep.subr.mxu0 0.0
    %457 = vmatpush1.msra.mxu0 0.0
    %458 = vmatprep.mubr.f32.mxu0 0.0
    %459 = vmatmul.mubr.f32.gmra.mrb[0].mxu0 %v392
    %v460 = vpop.f32.mrb[0].mxu0
    %v461 = vadd.f32 %v389, %v460
    %v462 = vpop.f32.mrb[0].mxu0
    %463 = vdwg.mxu0
    %v464 = vld [vmem:[#allocation2 + $0xf0] sm:$0xff]
    %v465 = vld [vmem:[#allocation2 + $0xf8] sm:$0xff]
    %v466 = vld [vmem:[#allocation2 + $0x100] sm:$0xff]
    %v467 = vld [vmem:[#allocation2 + $0x108] sm:$0xff]
    %v468 = vld [vmem:[%s4 + $0x4] sm:$0x1]
    %v469 = vlaneseq
    %v470 = vshrl.u32 %v469, 7
    %v471 = vsub.s32 0, %v470
    %v472 = vrot.slane %v468, %v471
    %473 = vmatprep.subr.mxu0 0.0
    %474 = vmatpush1.msra.mxu0 %v464
    %475 = vmatprep.subr.mxu0 0.0
    %476 = vmatpush1.msra.mxu0 %v465
    %477 = vmatprep.subr.mxu0 0.0
    %478 = vmatpush1.msra.mxu0 %v466
    %479 = vmatprep.subr.mxu0 0.0
    %480 = vmatpush1.msra.mxu0 %v467
    %481 = vmatprep.subr.mxu0 0.0
    %482 = vmatpush1.msra.mxu0 0.0
    %483 = vmatprep.subr.mxu0 0.0
    %484 = vmatpush1.msra.mxu0 0.0
    %485 = vmatprep.subr.mxu0 0.0
    %486 = vmatpush1.msra.mxu0 0.0
    %487 = vmatprep.subr.mxu0 0.0
    %488 = vmatpush1.msra.mxu0 0.0
    %489 = vmatprep.subr.mxu0 0.0
    %490 = vmatpush1.msra.mxu0 0.0
    %491 = vmatprep.subr.mxu0 0.0
    %492 = vmatpush1.msra.mxu0 0.0
    %493 = vmatprep.subr.mxu0 0.0
    %494 = vmatpush1.msra.mxu0 0.0
    %495 = vmatprep.subr.mxu0 0.0
    %496 = vmatpush1.msra.mxu0 0.0
    %497 = vmatprep.subr.mxu0 0.0
    %498 = vmatpush1.msra.mxu0 0.0
    %499 = vmatprep.subr.mxu0 0.0
    %500 = vmatpush1.msra.mxu0 0.0
    %501 = vmatprep.subr.mxu0 0.0
    %502 = vmatpush1.msra.mxu0 0.0
    %503 = vmatprep.subr.mxu0 0.0
    %504 = vmatpush1.msra.mxu0 0.0
    %505 = vmatprep.subr.mxu0 0.0
    %506 = vmatpush1.msra.mxu0 0.0
    %507 = vmatprep.subr.mxu0 0.0
    %508 = vmatpush1.msra.mxu0 0.0
    %509 = vmatprep.subr.mxu0 0.0
    %510 = vmatpush1.msra.mxu0 0.0
    %511 = vmatprep.subr.mxu0 0.0
    %512 = vmatpush1.msra.mxu0 0.0
    %513 = vmatprep.subr.mxu0 0.0
    %514 = vmatpush1.msra.mxu0 0.0
    %515 = vmatprep.subr.mxu0 0.0
    %516 = vmatpush1.msra.mxu0 0.0
    %517 = vmatprep.subr.mxu0 0.0
    %518 = vmatpush1.msra.mxu0 0.0
    %519 = vmatprep.subr.mxu0 0.0
    %520 = vmatpush1.msra.mxu0 0.0
    %521 = vmatprep.subr.mxu0 0.0
    %522 = vmatpush1.msra.mxu0 0.0
    %523 = vmatprep.subr.mxu0 0.0
    %524 = vmatpush1.msra.mxu0 0.0
    %525 = vmatprep.subr.mxu0 0.0
    %526 = vmatpush1.msra.mxu0 0.0
    %527 = vmatprep.subr.mxu0 0.0
    %528 = vmatpush1.msra.mxu0 0.0
    %529 = vmatprep.subr.mxu0 0.0
    %530 = vmatpush1.msra.mxu0 0.0
    %531 = vmatprep.subr.mxu0 0.0
    %532 = vmatpush1.msra.mxu0 0.0
    %533 = vmatprep.subr.mxu0 0.0
    %534 = vmatpush1.msra.mxu0 0.0
    %535 = vmatprep.subr.mxu0 0.0
    %536 = vmatpush1.msra.mxu0 0.0
    %537 = vmatprep.mubr.f32.mxu0 0.0
    %538 = vmatmul.mubr.f32.gmra.mrb[0].mxu0 %v392
    %v539 = vpop.f32.mrb[0].mxu0
    %v540 = vadd.f32 %v472, %v539
    %v541 = vpop.f32.mrb[0].mxu0
    %542 = vdwg.mxu0
    %v543 = vsub.f32 0.0, %v540
    %v544 = vmul.f32 %v543, 1.442695
    %v545 = vpow.pop %v544
    %v546 = vadd.f32 %v545, 1.0
    %v547 = vrcp.pop %v546
    %v548 = vmul.f32 1.0, %v547
    %v549 = vmul.f32 %v548, 0.9
    %v550 = vadd.f32 %v549, 0.1
    %v551 = vand.u32 2147483647, %v550
    %v552 = vmul.f32 %v551, %v37
    %v553 = vadd.f32 %v461, %v552
    %v554 = vld [vmem:[#allocation2 + $0x110] sm:$0xff]
    %v555 = vld [vmem:[#allocation2 + $0x118] sm:$0xff]
    %v556 = vld [vmem:[#allocation2 + $0x120] sm:$0xff]
    %v557 = vld [vmem:[#allocation2 + $0x128] sm:$0xff]
    %v558 = vld [vmem:[#allocation2 + $0x130] sm:$0xff]
    %v559 = vld [vmem:[#allocation2 + $0x138] sm:$0xff]
    %v560 = vld [vmem:[#allocation2 + $0x140] sm:$0xff]
    %v561 = vld [vmem:[#allocation2 + $0x148] sm:$0xff]
    %v562 = vld [vmem:[#allocation2 + $0x150] sm:$0xff]
    %v563 = vld [vmem:[#allocation2 + $0x158] sm:$0xff]
    %v564 = vld [vmem:[#allocation2 + $0x160] sm:$0xff]
    %v565 = vld [vmem:[#allocation2 + $0x168] sm:$0xff]
    %v566 = vld [vmem:[#allocation2 + $0x170] sm:$0xff]
    %v567 = vld [vmem:[#allocation2 + $0x178] sm:$0xff]
    %v568 = vld [vmem:[#allocation2 + $0x180] sm:$0xff]
    %v569 = vld [vmem:[#allocation2 + $0x188] sm:$0xff]
    %v570 = vld [vmem:[#allocation2 + $0x190] sm:$0xff]
    %v571 = vld [vmem:[#allocation2 + $0x198] sm:$0xff]
    %vm572 = vcmask 130048
    %v574 = vsel %vm572, %v553, 0
    %576 = vmatprep.subr.mxu0 0.0
    %577 = vmatpush1.msra.mxu0 %v570
    %578 = vmatprep.subr.mxu0 0.0
    %579 = vmatpush1.msra.mxu0 %v571
    %580 = vmatprep.subr.mxu0 0.0
    %581 = vmatpush1.msra.mxu0 0.0
    %582 = vmatprep.subr.mxu0 0.0
    %583 = vmatpush1.msra.mxu0 0.0
    %584 = vmatprep.subr.mxu0 0.0
    %585 = vmatpush1.msra.mxu0 0.0
    %586 = vmatprep.subr.mxu0 0.0
    %587 = vmatpush1.msra.mxu0 0.0
    %588 = vmatprep.subr.mxu0 0.0
    %589 = vmatpush1.msra.mxu0 0.0
    %590 = vmatprep.subr.mxu0 0.0
    %591 = vmatpush1.msra.mxu0 0.0
    %592 = vmatprep.subr.mxu0 0.0
    %593 = vmatpush1.msra.mxu0 0.0
    %594 = vmatprep.subr.mxu0 0.0
    %595 = vmatpush1.msra.mxu0 0.0
    %596 = vmatprep.subr.mxu0 0.0
    %597 = vmatpush1.msra.mxu0 0.0
    %598 = vmatprep.subr.mxu0 0.0
    %599 = vmatpush1.msra.mxu0 0.0
    %600 = vmatprep.subr.mxu0 0.0
    %601 = vmatpush1.msra.mxu0 0.0
    %602 = vmatprep.subr.mxu0 0.0
    %603 = vmatpush1.msra.mxu0 0.0
    %604 = vmatprep.subr.mxu0 0.0
    %605 = vmatpush1.msra.mxu0 0.0
    %606 = vmatprep.subr.mxu0 0.0
    %607 = vmatpush1.msra.mxu0 0.0
    %608 = vmatprep.subr.mxu0 0.0
    %609 = vmatpush1.msra.mxu0 0.0
    %610 = vmatprep.subr.mxu0 0.0
    %611 = vmatpush1.msra.mxu0 0.0
    %612 = vmatprep.subr.mxu0 0.0
    %613 = vmatpush1.msra.mxu0 0.0
    %614 = vmatprep.subr.mxu0 0.0
    %615 = vmatpush1.msra.mxu0 0.0
    %616 = vmatprep.subr.mxu0 0.0
    %617 = vmatpush1.msra.mxu0 0.0
    %618 = vmatprep.subr.mxu0 0.0
    %619 = vmatpush1.msra.mxu0 0.0
    %620 = vmatprep.subr.mxu0 0.0
    %621 = vmatpush1.msra.mxu0 0.0
    %622 = vmatprep.subr.mxu0 0.0
    %623 = vmatpush1.msra.mxu0 0.0
    %624 = vmatprep.subr.mxu0 0.0
    %625 = vmatpush1.msra.mxu0 0.0
    %626 = vmatprep.subr.mxu0 0.0
    %627 = vmatpush1.msra.mxu0 0.0
    %628 = vmatprep.subr.mxu0 0.0
    %629 = vmatpush1.msra.mxu0 0.0
    %630 = vmatprep.subr.mxu0 0.0
    %631 = vmatpush1.msra.mxu0 0.0
    %632 = vmatprep.subr.mxu0 0.0
    %633 = vmatpush1.msra.mxu0 0.0
    %634 = vmatprep.subr.mxu0 0.0
    %635 = vmatpush1.msra.mxu0 0.0
    %636 = vmatprep.subr.mxu0 0.0
    %637 = vmatpush1.msra.mxu0 0.0
    %638 = vmatprep.subr.mxu0 0.0
    %639 = vmatpush1.msra.mxu0 0.0
    %640 = vmatprep.mubr.f32.mxu0 0.0
    %641 = vmatmul.mubr.f32.gmra.mrb[0].mxu0 %v574
    %v642 = vpop.f32.mrb[0].mxu0
    %v643 = vadd.f32 0.0, %v642
    %v644 = vpop.f32.mrb[0].mxu0
    %645 = vdwg.mxu0
    %646 = vmatprep.subr.mxu0 0.0
    %647 = vmatpush1.msra.mxu0 %v554
    %648 = vmatprep.subr.mxu0 0.0
    %649 = vmatpush1.msra.mxu0 %v555
    %650 = vmatprep.subr.mxu0 0.0
    %651 = vmatpush1.msra.mxu0 %v556
    %652 = vmatprep.subr.mxu0 0.0
    %653 = vmatpush1.msra.mxu0 %v557
    %654 = vmatprep.subr.mxu0 0.0
    %655 = vmatpush1.msra.mxu0 %v558
    %656 = vmatprep.subr.mxu0 0.0
    %657 = vmatpush1.msra.mxu0 %v559
    %658 = vmatprep.subr.mxu0 0.0
    %659 = vmatpush1.msra.mxu0 %v560
    %660 = vmatprep.subr.mxu0 0.0
    %661 = vmatpush1.msra.mxu0 %v561
    %662 = vmatprep.subr.mxu0 0.0
    %663 = vmatpush1.msra.mxu0 %v562
    %664 = vmatprep.subr.mxu0 0.0
    %665 = vmatpush1.msra.mxu0 %v563
    %666 = vmatprep.subr.mxu0 0.0
    %667 = vmatpush1.msra.mxu0 %v564
    %668 = vmatprep.subr.mxu0 0.0
    %669 = vmatpush1.msra.mxu0 %v565
    %670 = vmatprep.subr.mxu0 0.0
    %671 = vmatpush1.msra.mxu0 %v566
    %672 = vmatprep.subr.mxu0 0.0
    %673 = vmatpush1.msra.mxu0 %v567
    %674 = vmatprep.subr.mxu0 0.0
    %675 = vmatpush1.msra.mxu0 %v568
    %676 = vmatprep.subr.mxu0 0.0
    %677 = vmatpush1.msra.mxu0 %v569
    %678 = vmatprep.subr.mxu0 0.0
    %679 = vmatpush1.msra.mxu0 0.0
    %680 = vmatprep.subr.mxu0 0.0
    %681 = vmatpush1.msra.mxu0 0.0
    %682 = vmatprep.subr.mxu0 0.0
    %683 = vmatpush1.msra.mxu0 0.0
    %684 = vmatprep.subr.mxu0 0.0
    %685 = vmatpush1.msra.mxu0 0.0
    %686 = vmatprep.subr.mxu0 0.0
    %687 = vmatpush1.msra.mxu0 0.0
    %688 = vmatprep.subr.mxu0 0.0
    %689 = vmatpush1.msra.mxu0 0.0
    %690 = vmatprep.subr.mxu0 0.0
    %691 = vmatpush1.msra.mxu0 0.0
    %692 = vmatprep.subr.mxu0 0.0
    %693 = vmatpush1.msra.mxu0 0.0
    %694 = vmatprep.subr.mxu0 0.0
    %695 = vmatpush1.msra.mxu0 0.0
    %696 = vmatprep.subr.mxu0 0.0
    %697 = vmatpush1.msra.mxu0 0.0
    %698 = vmatprep.subr.mxu0 0.0
    %699 = vmatpush1.msra.mxu0 0.0
    %700 = vmatprep.subr.mxu0 0.0
    %701 = vmatpush1.msra.mxu0 0.0
    %702 = vmatprep.subr.mxu0 0.0
    %703 = vmatpush1.msra.mxu0 0.0
    %704 = vmatprep.subr.mxu0 0.0
    %705 = vmatpush1.msra.mxu0 0.0
    %706 = vmatprep.subr.mxu0 0.0
    %707 = vmatpush1.msra.mxu0 0.0
    %708 = vmatprep.subr.mxu0 0.0
    %709 = vmatpush1.msra.mxu0 0.0
    %710 = vmatprep.mubr.f32.mxu0 0.0
    %711 = vmatmul.mubr.f32.gmra.mrb[0].mxu0 %v286
    %v712 = vpop.f32.mrb[0].mxu0
    %v713 = vadd.f32 %v643, %v712
    %v714 = vpop.f32.mrb[0].mxu0
    %715 = vdwg.mxu0
    %v716 = vld [vmem:[%s4 + $0x5] sm:$0x1]
    %v717 = vlaneseq
    %v718 = vshrl.u32 %v717, 7
    %v719 = vsub.s32 0, %v718
    %v720 = vrot.slane %v716, %v719
    %v721 = vadd.f32 %v713, %v720
    %v722 = vmax.f32 %v721, 0.0
    %v723 = vld [vmem:[#allocation2 + $0x1a0] sm:$0xff]
    %v724 = vld [vmem:[#allocation2 + $0x1a8] sm:$0xff]
    %v725 = vld [vmem:[#allocation2 + $0x1b0] sm:$0xff]
    %v726 = vld [vmem:[#allocation2 + $0x1b8] sm:$0xff]
    %v727 = vld [vmem:[#allocation2 + $0x1c0] sm:$0xff]
    %v728 = vld [vmem:[#allocation2 + $0x1c8] sm:$0xff]
    %v729 = vld [vmem:[#allocation2 + $0x1d0] sm:$0xff]
    %v730 = vld [vmem:[#allocation2 + $0x1d8] sm:$0xff]
    %v731 = vld [vmem:[%s4 + $0x6] sm:$0x1]
    %v732 = vlaneseq
    %v733 = vshrl.u32 %v732, 7
    %v734 = vsub.s32 0, %v733
    %v735 = vrot.slane %v731, %v734
    %v737 = vsel %vm215, %v722, 0
    %739 = vmatprep.subr.mxu0 0.0
    %740 = vmatpush1.msra.mxu0 %v723
    %741 = vmatprep.subr.mxu0 0.0
    %742 = vmatpush1.msra.mxu0 %v724
    %743 = vmatprep.subr.mxu0 0.0
    %744 = vmatpush1.msra.mxu0 %v725
    %745 = vmatprep.subr.mxu0 0.0
    %746 = vmatpush1.msra.mxu0 %v726
    %747 = vmatprep.subr.mxu0 0.0
    %748 = vmatpush1.msra.mxu0 %v727
    %749 = vmatprep.subr.mxu0 0.0
    %750 = vmatpush1.msra.mxu0 %v728
    %751 = vmatprep.subr.mxu0 0.0
    %752 = vmatpush1.msra.mxu0 %v729
    %753 = vmatprep.subr.mxu0 0.0
    %754 = vmatpush1.msra.mxu0 %v730
    %755 = vmatprep.subr.mxu0 0.0
    %756 = vmatpush1.msra.mxu0 0.0
    %757 = vmatprep.subr.mxu0 0.0
    %758 = vmatpush1.msra.mxu0 0.0
    %759 = vmatprep.subr.mxu0 0.0
    %760 = vmatpush1.msra.mxu0 0.0
    %761 = vmatprep.subr.mxu0 0.0
    %762 = vmatpush1.msra.mxu0 0.0
    %763 = vmatprep.subr.mxu0 0.0
    %764 = vmatpush1.msra.mxu0 0.0
    %765 = vmatprep.subr.mxu0 0.0
    %766 = vmatpush1.msra.mxu0 0.0
    %767 = vmatprep.subr.mxu0 0.0
    %768 = vmatpush1.msra.mxu0 0.0
    %769 = vmatprep.subr.mxu0 0.0
    %770 = vmatpush1.msra.mxu0 0.0
    %771 = vmatprep.subr.mxu0 0.0
    %772 = vmatpush1.msra.mxu0 0.0
    %773 = vmatprep.subr.mxu0 0.0
    %774 = vmatpush1.msra.mxu0 0.0
    %775 = vmatprep.subr.mxu0 0.0
    %776 = vmatpush1.msra.mxu0 0.0
    %777 = vmatprep.subr.mxu0 0.0
    %778 = vmatpush1.msra.mxu0 0.0
    %779 = vmatprep.subr.mxu0 0.0
    %780 = vmatpush1.msra.mxu0 0.0
    %781 = vmatprep.subr.mxu0 0.0
    %782 = vmatpush1.msra.mxu0 0.0
    %783 = vmatprep.subr.mxu0 0.0
    %784 = vmatpush1.msra.mxu0 0.0
    %785 = vmatprep.subr.mxu0 0.0
    %786 = vmatpush1.msra.mxu0 0.0
    %787 = vmatprep.subr.mxu0 0.0
    %788 = vmatpush1.msra.mxu0 0.0
    %789 = vmatprep.subr.mxu0 0.0
    %790 = vmatpush1.msra.mxu0 0.0
    %791 = vmatprep.subr.mxu0 0.0
    %792 = vmatpush1.msra.mxu0 0.0
    %793 = vmatprep.subr.mxu0 0.0
    %794 = vmatpush1.msra.mxu0 0.0
    %795 = vmatprep.subr.mxu0 0.0
    %796 = vmatpush1.msra.mxu0 0.0
    %797 = vmatprep.subr.mxu0 0.0
    %798 = vmatpush1.msra.mxu0 0.0
    %799 = vmatprep.subr.mxu0 0.0
    %800 = vmatpush1.msra.mxu0 0.0
    %801 = vmatprep.subr.mxu0 0.0
    %802 = vmatpush1.msra.mxu0 0.0
    %803 = vmatprep.mubr.f32.mxu0 0.0
    %804 = vmatmul.mubr.f32.gmra.mrb[0].mxu0 %v737
    %v805 = vpop.f32.mrb[0].mxu0
    %v806 = vadd.f32 %v735, %v805
    %v807 = vpop.f32.mrb[0].mxu0
    %808 = vdwg.mxu0
    %v809 = vmax.f32 %v806, 0.0
    %v810 = vld [vmem:[#allocation2 + $0x1e0] sm:$0xff]
    %v811 = vld [vmem:[#allocation2 + $0x1e8] sm:$0xff]
    %v812 = vld [vmem:[#allocation2 + $0x1f0] sm:$0xff]
    %v813 = vld [vmem:[#allocation2 + $0x1f8] sm:$0xff]
    %v814 = vld [vmem:[#allocation2 + $0x200] sm:$0xff]
    %v815 = vld [vmem:[#allocation2 + $0x208] sm:$0xff]
    %v816 = vld [vmem:[#allocation2 + $0x210] sm:$0xff]
    %v817 = vld [vmem:[#allocation2 + $0x218] sm:$0xff]
    %v818 = vld [vmem:[%s4 + $0x7] sm:$0x1]
    %v819 = vlaneseq
    %v820 = vshrl.u32 %v819, 7
    %v821 = vsub.s32 0, %v820
    %v822 = vrot.slane %v818, %v821
    %v824 = vsel %vm215, %v809, 0
    %826 = vmatprep.subr.mxu0 0.0
    %827 = vmatpush1.msra.mxu0 %v810
    %828 = vmatprep.subr.mxu0 0.0
    %829 = vmatpush1.msra.mxu0 %v811
    %830 = vmatprep.subr.mxu0 0.0
    %831 = vmatpush1.msra.mxu0 %v812
    %832 = vmatprep.subr.mxu0 0.0
    %833 = vmatpush1.msra.mxu0 %v813
    %834 = vmatprep.subr.mxu0 0.0
    %835 = vmatpush1.msra.mxu0 %v814
    %836 = vmatprep.subr.mxu0 0.0
    %837 = vmatpush1.msra.mxu0 %v815
    %838 = vmatprep.subr.mxu0 0.0
    %839 = vmatpush1.msra.mxu0 %v816
    %840 = vmatprep.subr.mxu0 0.0
    %841 = vmatpush1.msra.mxu0 %v817
    %842 = vmatprep.subr.mxu0 0.0
    %843 = vmatpush1.msra.mxu0 0.0
    %844 = vmatprep.subr.mxu0 0.0
    %845 = vmatpush1.msra.mxu0 0.0
    %846 = vmatprep.subr.mxu0 0.0
    %847 = vmatpush1.msra.mxu0 0.0
    %848 = vmatprep.subr.mxu0 0.0
    %849 = vmatpush1.msra.mxu0 0.0
    %850 = vmatprep.subr.mxu0 0.0
    %851 = vmatpush1.msra.mxu0 0.0
    %852 = vmatprep.subr.mxu0 0.0
    %853 = vmatpush1.msra.mxu0 0.0
    %854 = vmatprep.subr.mxu0 0.0
    %855 = vmatpush1.msra.mxu0 0.0
    %856 = vmatprep.subr.mxu0 0.0
    %857 = vmatpush1.msra.mxu0 0.0
    %858 = vmatprep.subr.mxu0 0.0
    %859 = vmatpush1.msra.mxu0 0.0
    %860 = vmatprep.subr.mxu0 0.0
    %861 = vmatpush1.msra.mxu0 0.0
    %862 = vmatprep.subr.mxu0 0.0
    %863 = vmatpush1.msra.mxu0 0.0
    %864 = vmatprep.subr.mxu0 0.0
    %865 = vmatpush1.msra.mxu0 0.0
    %866 = vmatprep.subr.mxu0 0.0
    %867 = vmatpush1.msra.mxu0 0.0
    %868 = vmatprep.subr.mxu0 0.0
    %869 = vmatpush1.msra.mxu0 0.0
    %870 = vmatprep.subr.mxu0 0.0
    %871 = vmatpush1.msra.mxu0 0.0
    %872 = vmatprep.subr.mxu0 0.0
    %873 = vmatpush1.msra.mxu0 0.0
    %874 = vmatprep.subr.mxu0 0.0
    %875 = vmatpush1.msra.mxu0 0.0
    %876 = vmatprep.subr.mxu0 0.0
    %877 = vmatpush1.msra.mxu0 0.0
    %878 = vmatprep.subr.mxu0 0.0
    %879 = vmatpush1.msra.mxu0 0.0
    %880 = vmatprep.subr.mxu0 0.0
    %881 = vmatpush1.msra.mxu0 0.0
    %882 = vmatprep.subr.mxu0 0.0
    %883 = vmatpush1.msra.mxu0 0.0
    %884 = vmatprep.subr.mxu0 0.0
    %885 = vmatpush1.msra.mxu0 0.0
    %886 = vmatprep.subr.mxu0 0.0
    %887 = vmatpush1.msra.mxu0 0.0
    %888 = vmatprep.subr.mxu0 0.0
    %889 = vmatpush1.msra.mxu0 0.0
    %890 = vmatprep.mubr.f32.mxu0 0.0
    %891 = vmatmul.mubr.f32.gmra.mrb[0].mxu0 %v824
    %v892 = vpop.f32.mrb[0].mxu0
    %v893 = vadd.f32 %v822, %v892
    %v894 = vpop.f32.mrb[0].mxu0
    %895 = vdwg.mxu0
    %v896 = vmax.f32 %v893, 0.0
    %v897 = vld [vmem:[#allocation2 + $0x220] sm:$0xff]
    %v898 = vld [vmem:[#allocation2 + $0x228] sm:$0xff]
    %v899 = vld [vmem:[#allocation2 + $0x230] sm:$0xff]
    %v900 = vld [vmem:[#allocation2 + $0x238] sm:$0xff]
    %v901 = vld [vmem:[#allocation2 + $0x240] sm:$0xff]
    %v902 = vld [vmem:[#allocation2 + $0x248] sm:$0xff]
    %v903 = vld [vmem:[#allocation2 + $0x250] sm:$0xff]
    %v904 = vld [vmem:[#allocation2 + $0x258] sm:$0xff]
    %v905 = vld [vmem:[%s4 + $0x8] sm:$0x1]
    %v906 = vlaneseq
    %v907 = vshrl.u32 %v906, 7
    %v908 = vsub.s32 0, %v907
    %v909 = vrot.slane %v905, %v908
    %v911 = vsel %vm215, %v896, 0
    %913 = vmatprep.subr.mxu0 0.0
    %914 = vmatpush1.msra.mxu0 %v897
    %915 = vmatprep.subr.mxu0 0.0
    %916 = vmatpush1.msra.mxu0 %v898
    %917 = vmatprep.subr.mxu0 0.0
    %918 = vmatpush1.msra.mxu0 %v899
    %919 = vmatprep.subr.mxu0 0.0
    %920 = vmatpush1.msra.mxu0 %v900
    %921 = vmatprep.subr.mxu0 0.0
    %922 = vmatpush1.msra.mxu0 %v901
    %923 = vmatprep.subr.mxu0 0.0
    %924 = vmatpush1.msra.mxu0 %v902
    %925 = vmatprep.subr.mxu0 0.0
    %926 = vmatpush1.msra.mxu0 %v903
    %927 = vmatprep.subr.mxu0 0.0
    %928 = vmatpush1.msra.mxu0 %v904
    %929 = vmatprep.subr.mxu0 0.0
    %930 = vmatpush1.msra.mxu0 0.0
    %931 = vmatprep.subr.mxu0 0.0
    %932 = vmatpush1.msra.mxu0 0.0
    %933 = vmatprep.subr.mxu0 0.0
    %934 = vmatpush1.msra.mxu0 0.0
    %935 = vmatprep.subr.mxu0 0.0
    %936 = vmatpush1.msra.mxu0 0.0
    %937 = vmatprep.subr.mxu0 0.0
    %938 = vmatpush1.msra.mxu0 0.0
    %939 = vmatprep.subr.mxu0 0.0
    %940 = vmatpush1.msra.mxu0 0.0
    %941 = vmatprep.subr.mxu0 0.0
    %942 = vmatpush1.msra.mxu0 0.0
    %943 = vmatprep.subr.mxu0 0.0
    %944 = vmatpush1.msra.mxu0 0.0
    %945 = vmatprep.subr.mxu0 0.0
    %946 = vmatpush1.msra.mxu0 0.0
    %947 = vmatprep.subr.mxu0 0.0
    %948 = vmatpush1.msra.mxu0 0.0
    %949 = vmatprep.subr.mxu0 0.0
    %950 = vmatpush1.msra.mxu0 0.0
    %951 = vmatprep.subr.mxu0 0.0
    %952 = vmatpush1.msra.mxu0 0.0
    %953 = vmatprep.subr.mxu0 0.0
    %954 = vmatpush1.msra.mxu0 0.0
    %955 = vmatprep.subr.mxu0 0.0
    %956 = vmatpush1.msra.mxu0 0.0
    %957 = vmatprep.subr.mxu0 0.0
    %958 = vmatpush1.msra.mxu0 0.0
    %959 = vmatprep.subr.mxu0 0.0
    %960 = vmatpush1.msra.mxu0 0.0
    %961 = vmatprep.subr.mxu0 0.0
    %962 = vmatpush1.msra.mxu0 0.0
    %963 = vmatprep.subr.mxu0 0.0
    %964 = vmatpush1.msra.mxu0 0.0
    %965 = vmatprep.subr.mxu0 0.0
    %966 = vmatpush1.msra.mxu0 0.0
    %967 = vmatprep.subr.mxu0 0.0
    %968 = vmatpush1.msra.mxu0 0.0
    %969 = vmatprep.subr.mxu0 0.0
    %970 = vmatpush1.msra.mxu0 0.0
    %971 = vmatprep.subr.mxu0 0.0
    %972 = vmatpush1.msra.mxu0 0.0
    %973 = vmatprep.subr.mxu0 0.0
    %974 = vmatpush1.msra.mxu0 0.0
    %975 = vmatprep.subr.mxu0 0.0
    %976 = vmatpush1.msra.mxu0 0.0
    %977 = vmatprep.mubr.f32.mxu0 0.0
    %978 = vmatmul.mubr.f32.gmra.mrb[0].mxu0 %v911
    %v979 = vpop.f32.mrb[0].mxu0
    %v980 = vadd.f32 %v909, %v979
    %v981 = vpop.f32.mrb[0].mxu0
    %982 = vdwg.mxu0
    %v983 = vmax.f32 %v980, 0.0
    %v984 = vld [vmem:[#allocation2 + $0x260] sm:$0xff]
    %v985 = vld [vmem:[#allocation2 + $0x268] sm:$0xff]
    %v986 = vld [vmem:[#allocation2 + $0x270] sm:$0xff]
    %v987 = vld [vmem:[#allocation2 + $0x278] sm:$0xff]
    %v988 = vld [vmem:[#allocation2 + $0x280] sm:$0xff]
    %v989 = vld [vmem:[#allocation2 + $0x288] sm:$0xff]
    %v990 = vld [vmem:[#allocation2 + $0x290] sm:$0xff]
    %v991 = vld [vmem:[#allocation2 + $0x298] sm:$0xff]
    %v992 = vld [vmem:[%s4 + $0x9] sm:$0x1]
    %v993 = vlaneseq
    %v994 = vshrl.u32 %v993, 7
    %v995 = vsub.s32 0, %v994
    %v996 = vrot.slane %v992, %v995
    %v998 = vsel %vm215, %v983, 0
    %1000 = vmatprep.subr.mxu0 0.0
    %1001 = vmatpush1.msra.mxu0 %v984
    %1002 = vmatprep.subr.mxu0 0.0
    %1003 = vmatpush1.msra.mxu0 %v985
    %1004 = vmatprep.subr.mxu0 0.0
    %1005 = vmatpush1.msra.mxu0 %v986
    %1006 = vmatprep.subr.mxu0 0.0
    %1007 = vmatpush1.msra.mxu0 %v987
    %1008 = vmatprep.subr.mxu0 0.0
    %1009 = vmatpush1.msra.mxu0 %v988
    %1010 = vmatprep.subr.mxu0 0.0
    %1011 = vmatpush1.msra.mxu0 %v989
    %1012 = vmatprep.subr.mxu0 0.0
    %1013 = vmatpush1.msra.mxu0 %v990
    %1014 = vmatprep.subr.mxu0 0.0
    %1015 = vmatpush1.msra.mxu0 %v991
    %1016 = vmatprep.subr.mxu0 0.0
    %1017 = vmatpush1.msra.mxu0 0.0
    %1018 = vmatprep.subr.mxu0 0.0
    %1019 = vmatpush1.msra.mxu0 0.0
    %1020 = vmatprep.subr.mxu0 0.0
    %1021 = vmatpush1.msra.mxu0 0.0
    %1022 = vmatprep.subr.mxu0 0.0
    %1023 = vmatpush1.msra.mxu0 0.0
    %1024 = vmatprep.subr.mxu0 0.0
    %1025 = vmatpush1.msra.mxu0 0.0
    %1026 = vmatprep.subr.mxu0 0.0
    %1027 = vmatpush1.msra.mxu0 0.0
    %1028 = vmatprep.subr.mxu0 0.0
    %1029 = vmatpush1.msra.mxu0 0.0
    %1030 = vmatprep.subr.mxu0 0.0
    %1031 = vmatpush1.msra.mxu0 0.0
    %1032 = vmatprep.subr.mxu0 0.0
    %1033 = vmatpush1.msra.mxu0 0.0
    %1034 = vmatprep.subr.mxu0 0.0
    %1035 = vmatpush1.msra.mxu0 0.0
    %1036 = vmatprep.subr.mxu0 0.0
    %1037 = vmatpush1.msra.mxu0 0.0
    %1038 = vmatprep.subr.mxu0 0.0
    %1039 = vmatpush1.msra.mxu0 0.0
    %1040 = vmatprep.subr.mxu0 0.0
    %1041 = vmatpush1.msra.mxu0 0.0
    %1042 = vmatprep.subr.mxu0 0.0
    %1043 = vmatpush1.msra.mxu0 0.0
    %1044 = vmatprep.subr.mxu0 0.0
    %1045 = vmatpush1.msra.mxu0 0.0
    %1046 = vmatprep.subr.mxu0 0.0
    %1047 = vmatpush1.msra.mxu0 0.0
    %1048 = vmatprep.subr.mxu0 0.0
    %1049 = vmatpush1.msra.mxu0 0.0
    %1050 = vmatprep.subr.mxu0 0.0
    %1051 = vmatpush1.msra.mxu0 0.0
    %1052 = vmatprep.subr.mxu0 0.0
    %1053 = vmatpush1.msra.mxu0 0.0
    %1054 = vmatprep.subr.mxu0 0.0
    %1055 = vmatpush1.msra.mxu0 0.0
    %1056 = vmatprep.subr.mxu0 0.0
    %1057 = vmatpush1.msra.mxu0 0.0
    %1058 = vmatprep.subr.mxu0 0.0
    %1059 = vmatpush1.msra.mxu0 0.0
    %1060 = vmatprep.subr.mxu0 0.0
    %1061 = vmatpush1.msra.mxu0 0.0
    %1062 = vmatprep.subr.mxu0 0.0
    %1063 = vmatpush1.msra.mxu0 0.0
    %1064 = vmatprep.mubr.f32.mxu0 0.0
    %1065 = vmatmul.mubr.f32.gmra.mrb[0].mxu0 %v998
    %v1066 = vpop.f32.mrb[0].mxu0
    %v1067 = vadd.f32 %v996, %v1066
    %v1068 = vpop.f32.mrb[0].mxu0
    %1069 = vdwg.mxu0
    %v1070 = vmax.f32 %v1067, 0.0
    %v1071 = vld [vmem:[#allocation2 + $0x2a0] sm:$0xff]
    %v1072 = vld [vmem:[#allocation2 + $0x2a8] sm:$0xff]
    %v1073 = vld [vmem:[#allocation2 + $0x2b0] sm:$0xff]
    %v1074 = vld [vmem:[#allocation2 + $0x2b8] sm:$0xff]
    %v1075 = vld [vmem:[#allocation2 + $0x2c0] sm:$0xff]
    %v1076 = vld [vmem:[#allocation2 + $0x2c8] sm:$0xff]
    %v1077 = vld [vmem:[#allocation2 + $0x2d0] sm:$0xff]
    %v1078 = vld [vmem:[#allocation2 + $0x2d8] sm:$0xff]
    %v1079 = vld [vmem:[%s4 + $0xa] sm:$0x1]
    %v1080 = vlaneseq
    %v1081 = vshrl.u32 %v1080, 7
    %v1082 = vsub.s32 0, %v1081
    %v1083 = vrot.slane %v1079, %v1082
    %v1085 = vsel %vm215, %v1070, 0
    %1087 = vmatprep.subr.mxu0 0.0
    %1088 = vmatpush1.msra.mxu0 %v1071
    %1089 = vmatprep.subr.mxu0 0.0
    %1090 = vmatpush1.msra.mxu0 %v1072
    %1091 = vmatprep.subr.mxu0 0.0
    %1092 = vmatpush1.msra.mxu0 %v1073
    %1093 = vmatprep.subr.mxu0 0.0
    %1094 = vmatpush1.msra.mxu0 %v1074
    %1095 = vmatprep.subr.mxu0 0.0
    %1096 = vmatpush1.msra.mxu0 %v1075
    %1097 = vmatprep.subr.mxu0 0.0
    %1098 = vmatpush1.msra.mxu0 %v1076
    %1099 = vmatprep.subr.mxu0 0.0
    %1100 = vmatpush1.msra.mxu0 %v1077
    %1101 = vmatprep.subr.mxu0 0.0
    %1102 = vmatpush1.msra.mxu0 %v1078
    %1103 = vmatprep.subr.mxu0 0.0
    %1104 = vmatpush1.msra.mxu0 0.0
    %1105 = vmatprep.subr.mxu0 0.0
    %1106 = vmatpush1.msra.mxu0 0.0
    %1107 = vmatprep.subr.mxu0 0.0
    %1108 = vmatpush1.msra.mxu0 0.0
    %1109 = vmatprep.subr.mxu0 0.0
    %1110 = vmatpush1.msra.mxu0 0.0
    %1111 = vmatprep.subr.mxu0 0.0
    %1112 = vmatpush1.msra.mxu0 0.0
    %1113 = vmatprep.subr.mxu0 0.0
    %1114 = vmatpush1.msra.mxu0 0.0
    %1115 = vmatprep.subr.mxu0 0.0
    %1116 = vmatpush1.msra.mxu0 0.0
    %1117 = vmatprep.subr.mxu0 0.0
    %1118 = vmatpush1.msra.mxu0 0.0
    %1119 = vmatprep.subr.mxu0 0.0
    %1120 = vmatpush1.msra.mxu0 0.0
    %1121 = vmatprep.subr.mxu0 0.0
    %1122 = vmatpush1.msra.mxu0 0.0
    %1123 = vmatprep.subr.mxu0 0.0
    %1124 = vmatpush1.msra.mxu0 0.0
    %1125 = vmatprep.subr.mxu0 0.0
    %1126 = vmatpush1.msra.mxu0 0.0
    %1127 = vmatprep.subr.mxu0 0.0
    %1128 = vmatpush1.msra.mxu0 0.0
    %1129 = vmatprep.subr.mxu0 0.0
    %1130 = vmatpush1.msra.mxu0 0.0
    %1131 = vmatprep.subr.mxu0 0.0
    %1132 = vmatpush1.msra.mxu0 0.0
    %1133 = vmatprep.subr.mxu0 0.0
    %1134 = vmatpush1.msra.mxu0 0.0
    %1135 = vmatprep.subr.mxu0 0.0
    %1136 = vmatpush1.msra.mxu0 0.0
    %1137 = vmatprep.subr.mxu0 0.0
    %1138 = vmatpush1.msra.mxu0 0.0
    %1139 = vmatprep.subr.mxu0 0.0
    %1140 = vmatpush1.msra.mxu0 0.0
    %1141 = vmatprep.subr.mxu0 0.0
    %1142 = vmatpush1.msra.mxu0 0.0
    %1143 = vmatprep.subr.mxu0 0.0
    %1144 = vmatpush1.msra.mxu0 0.0
    %1145 = vmatprep.subr.mxu0 0.0
    %1146 = vmatpush1.msra.mxu0 0.0
    %1147 = vmatprep.subr.mxu0 0.0
    %1148 = vmatpush1.msra.mxu0 0.0
    %1149 = vmatprep.subr.mxu0 0.0
    %1150 = vmatpush1.msra.mxu0 0.0
    %1151 = vmatprep.mubr.f32.mxu0 0.0
    %1152 = vmatmul.mubr.f32.gmra.mrb[0].mxu0 %v1085
    %v1153 = vpop.f32.mrb[0].mxu0
    %v1154 = vadd.f32 %v1083, %v1153
    %v1155 = vpop.f32.mrb[0].mxu0
    %1156 = vdwg.mxu0
    %v1157 = vmax.f32 %v1154, 0.0
    %v1158 = vld [vmem:[#allocation2 + $0x2e0] sm:$0xff]
    %v1159 = vld [vmem:[#allocation2 + $0x2e8] sm:$0xff]
    %v1160 = vld [vmem:[#allocation2 + $0x2f0] sm:$0xff]
    %v1161 = vld [vmem:[#allocation2 + $0x2f8] sm:$0xff]
    %v1162 = vld [vmem:[#allocation2 + $0x300] sm:$0xff]
    %v1163 = vld [vmem:[#allocation2 + $0x308] sm:$0xff]
    %v1164 = vld [vmem:[#allocation2 + $0x310] sm:$0xff]
    %v1165 = vld [vmem:[#allocation2 + $0x318] sm:$0xff]
    %v1166 = vld [vmem:[%s4 + $0xb] sm:$0x1]
    %v1167 = vlaneseq
    %v1168 = vshrl.u32 %v1167, 7
    %v1169 = vsub.s32 0, %v1168
    %v1170 = vrot.slane %v1166, %v1169
    %v1172 = vsel %vm215, %v1157, 0
    %1174 = vmatprep.subr.mxu0 0.0
    %1175 = vmatpush1.msra.mxu0 %v1158
    %1176 = vmatprep.subr.mxu0 0.0
    %1177 = vmatpush1.msra.mxu0 %v1159
    %1178 = vmatprep.subr.mxu0 0.0
    %1179 = vmatpush1.msra.mxu0 %v1160
    %1180 = vmatprep.subr.mxu0 0.0
    %1181 = vmatpush1.msra.mxu0 %v1161
    %1182 = vmatprep.subr.mxu0 0.0
    %1183 = vmatpush1.msra.mxu0 %v1162
    %1184 = vmatprep.subr.mxu0 0.0
    %1185 = vmatpush1.msra.mxu0 %v1163
    %1186 = vmatprep.subr.mxu0 0.0
    %1187 = vmatpush1.msra.mxu0 %v1164
    %1188 = vmatprep.subr.mxu0 0.0
    %1189 = vmatpush1.msra.mxu0 %v1165
    %1190 = vmatprep.subr.mxu0 0.0
    %1191 = vmatpush1.msra.mxu0 0.0
    %1192 = vmatprep.subr.mxu0 0.0
    %1193 = vmatpush1.msra.mxu0 0.0
    %1194 = vmatprep.subr.mxu0 0.0
    %1195 = vmatpush1.msra.mxu0 0.0
    %1196 = vmatprep.subr.mxu0 0.0
    %1197 = vmatpush1.msra.mxu0 0.0
    %1198 = vmatprep.subr.mxu0 0.0
    %1199 = vmatpush1.msra.mxu0 0.0
    %1200 = vmatprep.subr.mxu0 0.0
    %1201 = vmatpush1.msra.mxu0 0.0
    %1202 = vmatprep.subr.mxu0 0.0
    %1203 = vmatpush1.msra.mxu0 0.0
    %1204 = vmatprep.subr.mxu0 0.0
    %1205 = vmatpush1.msra.mxu0 0.0
    %1206 = vmatprep.subr.mxu0 0.0
    %1207 = vmatpush1.msra.mxu0 0.0
    %1208 = vmatprep.subr.mxu0 0.0
    %1209 = vmatpush1.msra.mxu0 0.0
    %1210 = vmatprep.subr.mxu0 0.0
    %1211 = vmatpush1.msra.mxu0 0.0
    %1212 = vmatprep.subr.mxu0 0.0
    %1213 = vmatpush1.msra.mxu0 0.0
    %1214 = vmatprep.subr.mxu0 0.0
    %1215 = vmatpush1.msra.mxu0 0.0
    %1216 = vmatprep.subr.mxu0 0.0
    %1217 = vmatpush1.msra.mxu0 0.0
    %1218 = vmatprep.subr.mxu0 0.0
    %1219 = vmatpush1.msra.mxu0 0.0
    %1220 = vmatprep.subr.mxu0 0.0
    %1221 = vmatpush1.msra.mxu0 0.0
    %1222 = vmatprep.subr.mxu0 0.0
    %1223 = vmatpush1.msra.mxu0 0.0
    %1224 = vmatprep.subr.mxu0 0.0
    %1225 = vmatpush1.msra.mxu0 0.0
    %1226 = vmatprep.subr.mxu0 0.0
    %1227 = vmatpush1.msra.mxu0 0.0
    %1228 = vmatprep.subr.mxu0 0.0
    %1229 = vmatpush1.msra.mxu0 0.0
    %1230 = vmatprep.subr.mxu0 0.0
    %1231 = vmatpush1.msra.mxu0 0.0
    %1232 = vmatprep.subr.mxu0 0.0
    %1233 = vmatpush1.msra.mxu0 0.0
    %1234 = vmatprep.subr.mxu0 0.0
    %1235 = vmatpush1.msra.mxu0 0.0
    %1236 = vmatprep.subr.mxu0 0.0
    %1237 = vmatpush1.msra.mxu0 0.0
    %1238 = vmatprep.mubr.f32.mxu0 0.0
    %1239 = vmatmul.mubr.f32.gmra.mrb[0].mxu0 %v1172
    %v1240 = vpop.f32.mrb[0].mxu0
    %v1241 = vadd.f32 %v1170, %v1240
    %v1242 = vpop.f32.mrb[0].mxu0
    %1243 = vdwg.mxu0
    %v1244 = vlaneseq
    %v1245 = vand.u32 %v1244, 127
    %vm1246 = vcmp.lt.s32.totalorder %v1245, 4
    %vm1247 = vcmp.lt.s32.totalorder %v1245, 8
    %v1248 = vmax.f32 %v1241, 0.0
    %v1249 = vand.u32 2147483647, %v1241
    %v1250 = vsub.f32 0.0, %v1249
    %v1251 = vmul.f32 %v1250, 1.442695
    %v1252 = vpow.pop %v1251
    %v1253 = vadd.f32 %v1252, 1.0
    %v1254 = vlog2.pop %v1253
    %v1255 = vmul.f32 %v1254, 0.6931472
    %v1256 = vadd.f32 %v1248, %v1255
    %v1257 = vsub.f32 0.0, %v1241
    %v1258 = vmul.f32 %v1257, 1.442695
    %v1259 = vpow.pop %v1258
    %v1260 = vadd.f32 %v1259, 1.0
    %v1261 = vrcp.pop %v1260
    %v1262 = vmul.f32 1.0, %v1261
    %v1263 = vsel %vm1247, %v1256, %v1262
    %v1264 = vsel %vm1246, %v1241, %v1263
    %vm1265 = vcmask 97280
    %1266 = vst.msk [vmem:[#allocation5] sm:$0xff] %vm1265, %v1264
    // Predicated region
    $region26: #{tpu_custom_call.1} parent=1 // pred_check
      _
    $region27: #{tpu_custom_call.1} parent=1 // pred_check_branch
      %1268 = sbr.rel (0) target = $region29
    $region28: #{tpu_custom_call.1} parent=1 // pred_region
      %s1270 = ssub.s32 128, 128
      %1271 = vsyncadd [#allocation4], %s1270
      %s1273 = sshll.u32 [#allocation5], 4
      %s1274 = int_to_ptr.vmem [resolvable:$true] %s1273
      %1276 = dma.vmem_to_hbm [thread:$0]  %s1274, 128, %s5, [#allocation4]
    $region29: #{tpu_custom_call.1} parent=1 // pred_fallthru
      _
    // Predicated region
    $region30: #{tpu_custom_call.1} parent=1 // pred_check
      _
    $region31: #{tpu_custom_call.1} parent=1 // pred_check_branch
      %1278 = sbr.rel (0) target = $region33
    $region32: #{tpu_custom_call.1} parent=1 // pred_region
      %1279 = dma.done [#allocation4], 128
    $region33: #{tpu_custom_call.1} parent=1 // pred_fallthru
      _
    %1280 = vsyncpa [#allocation3], 1
    %1281 = vsyncpa [#allocation4], 1

</llo_original>
